<compile_context>
chip_gen: v5e
topology: v5e:2x2
jax: 0.10.0
libtpu: 0.0.40
codegen_flags: <defaults>
</compile_context>

<pallas_src>
import jax
import jax.numpy as jnp
from jax import lax
from jax.experimental import pallas as pl
from jax.experimental.pallas import tpu as pltpu


def _self_attention_kernel(x_q_ref, x_kv_ref, wq_ref, bq_ref, wvk_ref, bvk_ref,
                           gamma_ref, out_ref, q_sc, m_sc, l_sc, acc_sc):
    """One (batch, query-tile, key-tile) grid step.

    x_q_ref : (1, TQ, C)   bf16  query-position tile of x
    x_kv_ref: (1, TK, C)   bf16  key/value-position tile of x
    wq_ref  : (C, Cq)      bf16  query projection (pre-transposed)
    bq_ref  : (1, Cq)      f32
    wvk_ref : (C, C + Cq)  bf16  fused [value | key] projection (pre-transposed)
    bvk_ref : (1, C + Cq)  f32
    gamma_ref: (1,)        f32   SMEM scalar
    out_ref : (1, TQ, C)   f32
    scratch : q_sc (TQ,Cq) bf16, m_sc/l_sc (TQ,1) f32, acc_sc (TQ,C) f32
    """
    ki = pl.program_id(2)
    C = acc_sc.shape[1]

    @pl.when(ki == 0)
    def _init():
        xq = x_q_ref[0]                                               # (TQ, C)
        q = jnp.dot(xq, wq_ref[...],
                    preferred_element_type=jnp.float32) + bq_ref[...]
        q_sc[...] = q.astype(jnp.bfloat16)                            # (TQ, Cq)
        m_sc[...] = jnp.full_like(m_sc, -jnp.inf)
        l_sc[...] = jnp.zeros_like(l_sc)
        acc_sc[...] = jnp.zeros_like(acc_sc)

    # Fused value/key projection of the key tile: one MXU push -> (TK, C+Cq).
    xkv = x_kv_ref[0]                                                 # (TK, C)
    vk = jnp.dot(xkv, wvk_ref[...],
                 preferred_element_type=jnp.float32) + bvk_ref[...]
    v = vk[:, :C].astype(jnp.bfloat16)                                # (TK, C)
    k = vk[:, C:].astype(jnp.bfloat16)                                # (TK, Cq)

    # energy tile: s[n, m] = <q_n, k_m>                               # (TQ, TK)
    s = lax.dot_general(q_sc[...], k, (((1,), (1,)), ((), ())),
                        preferred_element_type=jnp.float32)

    # online softmax update
    m_prev = m_sc[...]
    m_new = jnp.maximum(m_prev, jnp.max(s, axis=-1, keepdims=True))   # (TQ, 1)
    alpha = jnp.exp(m_prev - m_new)
    p = jnp.exp(s - m_new)                                            # (TQ, TK)
    l_sc[...] = alpha * l_sc[...] + jnp.sum(p, axis=-1, keepdims=True)
    acc_sc[...] = alpha * acc_sc[...] + jnp.dot(
        p.astype(jnp.bfloat16), v, preferred_element_type=jnp.float32)
    m_sc[...] = m_new

    @pl.when(ki == pl.num_programs(2) - 1)
    def _finalize():
        o = acc_sc[...] * pl.reciprocal(l_sc[...], approx=True)       # (TQ, C)
        out_ref[0] = gamma_ref[0] * o + x_q_ref[0].astype(jnp.float32)


def _pick_tile(n, requested):
    if requested is not None:
        assert n % requested == 0 and (requested % 8 == 0 or requested == n)
        return requested
    for cand in (512, 256, 128):        # biggest tile that divides N, VMEM-safe
        if n % cand == 0:
            return cand
    return n


def self_attention(x_nchw, wq, bq, wk, bk, wv, bv, gamma, *, tq=None, tk=None):
    """x_nchw: (B, C, W, H). Returns (B, C, W, H) float32, matching the torch
    SelfAttention.forward (1x1-conv q/k/v, softmax attention, gamma*out + x)."""
    B, C, W, H = x_nchw.shape
    N = W * H
    Cq = wq.shape[0]
    TQ = _pick_tile(N, tq)
    TK = _pick_tile(N, tk)

    # NCHW -> (B, N, C); bf16 halves HBM traffic and feeds the MXU directly.
    x = jnp.transpose(x_nchw.astype(jnp.bfloat16).reshape(B, C, N), (0, 2, 1))

    # Pre-transposed weights so every in-kernel matmul is plain NN / NT.
    wq_t = jnp.transpose(wq).astype(jnp.bfloat16)                        # (C, Cq)
    wvk_t = jnp.transpose(
        jnp.concatenate([wv, wk], axis=0)).astype(jnp.bfloat16)          # (C, C+Cq)
    bq_r = bq.reshape(1, Cq).astype(jnp.float32)
    bvk_r = jnp.concatenate([bv, bk], axis=0).reshape(1, C + Cq).astype(jnp.float32)
    g = gamma.reshape(1).astype(jnp.float32)

    grid = (B, N // TQ, N // TK)

    out = pl.pallas_call(
        _self_attention_kernel,
        out_shape=jax.ShapeDtypeStruct((B, N, C), jnp.float32),
        grid_spec=pltpu.PrefetchScalarGridSpec(
            num_scalar_prefetch=0,
            grid=grid,
            in_specs=[
                pl.BlockSpec((1, TQ, C), lambda b, qi, ki: (b, qi, 0)),   # x (q tile)
                pl.BlockSpec((1, TK, C), lambda b, qi, ki: (b, ki, 0)),   # x (kv tile)
                pl.BlockSpec((C, Cq), lambda b, qi, ki: (0, 0)),          # wq^T
                pl.BlockSpec((1, Cq), lambda b, qi, ki: (0, 0)),          # bq
                pl.BlockSpec((C, C + Cq), lambda b, qi, ki: (0, 0)),      # [wv|wk]^T
                pl.BlockSpec((1, C + Cq), lambda b, qi, ki: (0, 0)),      # [bv|bk]
                pl.BlockSpec(memory_space=pltpu.MemorySpace.SMEM),        # gamma
            ],
            out_specs=pl.BlockSpec((1, TQ, C), lambda b, qi, ki: (b, qi, 0)),
            scratch_shapes=[
                pltpu.VMEM((TQ, Cq), jnp.bfloat16),   # projected q tile
                pltpu.VMEM((TQ, 1), jnp.float32),     # running max
                pltpu.VMEM((TQ, 1), jnp.float32),     # running sum
                pltpu.VMEM((TQ, C), jnp.float32),     # output accumulator
            ],
        ),
        compiler_params=pltpu.CompilerParams(
            dimension_semantics=("parallel", "parallel", "arbitrary"),
            vmem_limit_bytes=48 * 1024 * 1024,
        ),
    )(x, x, wq_t, bq_r, wvk_t, bvk_r, g)

    # (B, N, C) -> NCHW
    return jnp.transpose(out, (0, 2, 1)).reshape(B, C, W, H)


def self_attention_ref(x_nchw, wq, bq, wk, bk, wv, bv, gamma):
    """Pure-JAX f32 reference mirroring the torch forward."""
    B, C, W, H = x_nchw.shape
    N = W * H
    xf = x_nchw.reshape(B, C, N)                                    # (B, C, N)
    q = jnp.einsum("oc,bcn->bon", wq, xf) + bq[None, :, None]       # (B, Cq, N)
    k = jnp.einsum("oc,bcn->bon", wk, xf) + bk[None, :, None]       # (B, Cq, N)
    v = jnp.einsum("oc,bcn->bon", wv, xf) + bv[None, :, None]       # (B, C,  N)
    energy = jnp.einsum("bqn,bqm->bnm", q, k)                       # (B, N, N)
    attn = jax.nn.softmax(energy, axis=-1)
    out = jnp.einsum("bcm,bnm->bcn", v, attn)                       # (B, C, N)
    return gamma[0] * out.reshape(B, C, W, H) + x_nchw


if __name__ == "__main__":
    key = jax.random.PRNGKey(0)
    B, C, W, H = 2, 16, 16, 16        # in_dim=16 -> query/key channels Cq=2, N=256
    Cq = C // 8

    ks = jax.random.split(key, 8)
    x = jax.random.normal(ks[0], (B, C, W, H), jnp.float32)
    wq = jax.random.normal(ks[1], (Cq, C), jnp.float32) * 0.1
    bq = jax.random.normal(ks[2], (Cq,), jnp.float32) * 0.1
    wk = jax.random.normal(ks[3], (Cq, C), jnp.float32) * 0.1
    bk = jax.random.normal(ks[4], (Cq,), jnp.float32) * 0.1
    wv = jax.random.normal(ks[5], (C, C), jnp.float32) * 0.1
    bv = jax.random.normal(ks[6], (C,), jnp.float32) * 0.1
    # torch inits gamma to 0 (output would equal x); use a nonzero value so the
    # attention path is actually exercised.
    gamma = jnp.array([0.5], jnp.float32)

    # TQ=TK=128 with N=256 exercises the online softmax across multiple key
    # tiles and multiple query tiles.
    out = self_attention(x, wq, bq, wk, bk, wv, bv, gamma, tq=128, tk=128)
    out = jax.block_until_ready(out)

    ref = self_attention_ref(x, wq, bq, wk, bk, wv, bv, gamma)
    assert out.shape == (B, C, W, H)
    # bf16 matmuls (f32 accumulation) + approx reciprocal -> relaxed tolerance.
    assert jnp.allclose(out, ref, atol=2e-2, rtol=2e-2), (
        "mismatch vs reference, max abs err = "
        f"{jnp.max(jnp.abs(out - ref))}")
    print("KERNEL_OK")
</pallas_src>

<mosaic_0001>
module attributes {stable_mosaic.version = 11 : i64} {
  func.func @_self_attention_kernel(%arg0: i32, %arg1: i32, %arg2: i32, %arg3: memref<1x128x16xbf16, #tpu.memory_space<vmem>>, %arg4: memref<1x128x16xbf16, #tpu.memory_space<vmem>>, %arg5: memref<16x2xbf16, #tpu.memory_space<vmem>>, %arg6: memref<1x2xf32, #tpu.memory_space<vmem>>, %arg7: memref<16x18xbf16, #tpu.memory_space<vmem>>, %arg8: memref<1x18xf32, #tpu.memory_space<vmem>>, %arg9: memref<1xf32, #tpu.memory_space<smem>>, %arg10: memref<1x128x16xf32, #tpu.memory_space<vmem>>, %arg11: memref<128x2xbf16, #tpu.memory_space<vmem>>, %arg12: memref<128x1xf32, #tpu.memory_space<vmem>>, %arg13: memref<128x1xf32, #tpu.memory_space<vmem>>, %arg14: memref<128x16xf32, #tpu.memory_space<vmem>>) attributes {dimension_semantics = [#tpu.dimension_semantics<parallel>, #tpu.dimension_semantics<parallel>, #tpu.dimension_semantics<arbitrary>], iteration_bounds = array<i64: 2, 2, 2>, scalar_prefetch = 0 : i64, scratch_operands = 4 : i64, tpu.core_type = #tpu.core_type<tc>, window_params = [{transform_indices = @transform_0, window_bounds = array<i64: 1, 128, 16>}, {transform_indices = @transform_1, window_bounds = array<i64: 1, 128, 16>}, {pipeline_mode = #tpu.pipeline_mode<synchronous>, transform_indices = @transform_2, window_bounds = array<i64: 16, 2>}, {pipeline_mode = #tpu.pipeline_mode<synchronous>, transform_indices = @transform_3, window_bounds = array<i64: 1, 2>}, {pipeline_mode = #tpu.pipeline_mode<synchronous>, transform_indices = @transform_4, window_bounds = array<i64: 16, 18>}, {pipeline_mode = #tpu.pipeline_mode<synchronous>, transform_indices = @transform_5, window_bounds = array<i64: 1, 18>}, {transform_indices = @transform_6, window_bounds = array<i64: 1>}, {transform_indices = @transform_7, window_bounds = array<i64: 1, 128, 16>}]} {
    %c0_i32 = arith.constant 0 : i32
    %0 = arith.cmpi eq, %arg2, %c0_i32 : i32
    %1 = arith.extui %0 : i1 to i32
    %c0_i32_0 = arith.constant 0 : i32
    %2 = arith.cmpi ne, %1, %c0_i32_0 : i32
    scf.if %2 {
      %c0_26 = arith.constant 0 : index
      %c0_27 = arith.constant 0 : index
      %c0_28 = arith.constant 0 : index
      %42 = vector.load %arg3[%c0_26, %c0_27, %c0_28] : memref<1x128x16xbf16, #tpu.memory_space<vmem>>, vector<1x128x16xbf16>
      %43 = vector.shape_cast %42 : vector<1x128x16xbf16> to vector<128x16xbf16>
      %c0_29 = arith.constant 0 : index
      %c0_30 = arith.constant 0 : index
      %44 = vector.load %arg5[%c0_29, %c0_30] : memref<16x2xbf16, #tpu.memory_space<vmem>>, vector<16x2xbf16>
      %cst_31 = arith.constant dense<0.000000e+00> : vector<128x2xf32>
      %45 = tpu.matmul %43, %44, %cst_31 {dimension_numbers = #tpu.dot_dimension_numbers<[1], [0], [0], [1], [0, 0, 1, 1], [], []>} : vector<128x16xbf16>, vector<16x2xbf16>, vector<128x2xf32> -> vector<128x2xf32>
      %c0_32 = arith.constant 0 : index
      %c0_33 = arith.constant 0 : index
      %46 = vector.load %arg6[%c0_32, %c0_33] : memref<1x2xf32, #tpu.memory_space<vmem>>, vector<1x2xf32>
      %47 = vector.broadcast %46 : vector<1x2xf32> to vector<128x2xf32>
      %48 = arith.addf %45, %47 : vector<128x2xf32>
      %49 = arith.truncf %48 : vector<128x2xf32> to vector<128x2xbf16>
      %c0_34 = arith.constant 0 : index
      %c0_35 = arith.constant 0 : index
      %50 = vector.load %arg11[%c0_34, %c0_35] : memref<128x2xbf16, #tpu.memory_space<vmem>>, vector<128x2xbf16>
      tpu.vector_store %arg11[%c0_34, %c0_35], %49 {strides = array<i32>} : memref<128x2xbf16, #tpu.memory_space<vmem>>, vector<128x2xbf16>,
      %cst_36 = arith.constant 0xFF800000 : f32
      %51 = vector.broadcast %cst_36 : f32 to vector<128x1xf32>
      %c0_37 = arith.constant 0 : index
      %c0_38 = arith.constant 0 : index
      %52 = vector.load %arg12[%c0_37, %c0_38] : memref<128x1xf32, #tpu.memory_space<vmem>>, vector<128x1xf32>
      tpu.vector_store %arg12[%c0_37, %c0_38], %51 {strides = array<i32>} : memref<128x1xf32, #tpu.memory_space<vmem>>, vector<128x1xf32>,
      %cst_39 = arith.constant 0.000000e+00 : f32
      %53 = vector.broadcast %cst_39 : f32 to vector<128x1xf32>
      %c0_40 = arith.constant 0 : index
      %c0_41 = arith.constant 0 : index
      %54 = vector.load %arg13[%c0_40, %c0_41] : memref<128x1xf32, #tpu.memory_space<vmem>>, vector<128x1xf32>
      tpu.vector_store %arg13[%c0_40, %c0_41], %53 {strides = array<i32>} : memref<128x1xf32, #tpu.memory_space<vmem>>, vector<128x1xf32>,
      %cst_42 = arith.constant 0.000000e+00 : f32
      %55 = vector.broadcast %cst_42 : f32 to vector<128x16xf32>
      %c0_43 = arith.constant 0 : index
      %c0_44 = arith.constant 0 : index
      %56 = vector.load %arg14[%c0_43, %c0_44] : memref<128x16xf32, #tpu.memory_space<vmem>>, vector<128x16xf32>
      tpu.vector_store %arg14[%c0_43, %c0_44], %55 {strides = array<i32>} : memref<128x16xf32, #tpu.memory_space<vmem>>, vector<128x16xf32>,
    } else {
    }
    %c0 = arith.constant 0 : index
    %c0_1 = arith.constant 0 : index
    %c0_2 = arith.constant 0 : index
    %3 = vector.load %arg4[%c0, %c0_1, %c0_2] : memref<1x128x16xbf16, #tpu.memory_space<vmem>>, vector<1x128x16xbf16>
    %4 = vector.shape_cast %3 : vector<1x128x16xbf16> to vector<128x16xbf16>
    %c0_3 = arith.constant 0 : index
    %c0_4 = arith.constant 0 : index
    %5 = vector.load %arg7[%c0_3, %c0_4] : memref<16x18xbf16, #tpu.memory_space<vmem>>, vector<16x18xbf16>
    %cst = arith.constant dense<0.000000e+00> : vector<128x18xf32>
    %6 = tpu.matmul %4, %5, %cst {dimension_numbers = #tpu.dot_dimension_numbers<[1], [0], [0], [1], [0, 0, 1, 1], [], []>} : vector<128x16xbf16>, vector<16x18xbf16>, vector<128x18xf32> -> vector<128x18xf32>
    %c0_5 = arith.constant 0 : index
    %c0_6 = arith.constant 0 : index
    %7 = vector.load %arg8[%c0_5, %c0_6] : memref<1x18xf32, #tpu.memory_space<vmem>>, vector<1x18xf32>
    %8 = vector.broadcast %7 : vector<1x18xf32> to vector<128x18xf32>
    %9 = arith.addf %6, %8 : vector<128x18xf32>
    %10 = vector.extract_strided_slice %9 {offsets = [0, 0], sizes = [128, 16], strides = [1, 1]} : vector<128x18xf32> to vector<128x16xf32>
    %11 = arith.truncf %10 : vector<128x16xf32> to vector<128x16xbf16>
    %12 = vector.extract_strided_slice %9 {offsets = [0, 16], sizes = [128, 2], strides = [1, 1]} : vector<128x18xf32> to vector<128x2xf32>
    %13 = arith.truncf %12 : vector<128x2xf32> to vector<128x2xbf16>
    %c0_7 = arith.constant 0 : index
    %c0_8 = arith.constant 0 : index
    %14 = vector.load %arg11[%c0_7, %c0_8] : memref<128x2xbf16, #tpu.memory_space<vmem>>, vector<128x2xbf16>
    %cst_9 = arith.constant dense<0.000000e+00> : vector<128x128xf32>
    %15 = tpu.matmul %14, %13, %cst_9 {dimension_numbers = #tpu.dot_dimension_numbers<[1], [1], [0], [0], [0, 0, 1, 0], [], []>} : vector<128x2xbf16>, vector<128x2xbf16>, vector<128x128xf32> -> vector<128x128xf32>
    %c0_10 = arith.constant 0 : index
    %c0_11 = arith.constant 0 : index
    %16 = vector.load %arg12[%c0_10, %c0_11] : memref<128x1xf32, #tpu.memory_space<vmem>>, vector<128x1xf32>
    %cst_12 = arith.constant dense<0xFF800000> : vector<128xf32>
    %17 = vector.multi_reduction <maximumf>, %15, %cst_12 [1] : vector<128x128xf32> to vector<128xf32>
    %18 = vector.shape_cast %17 : vector<128xf32> to vector<128x1xf32>
    %19 = arith.maximumf %16, %18 : vector<128x1xf32>
    %20 = arith.subf %16, %19 : vector<128x1xf32>
    %21 = math.exp %20 : vector<128x1xf32>
    %22 = vector.broadcast %19 : vector<128x1xf32> to vector<128x128xf32>
    %23 = arith.subf %15, %22 : vector<128x128xf32>
    %24 = math.exp %23 : vector<128x128xf32>
    %c0_13 = arith.constant 0 : index
    %c0_14 = arith.constant 0 : index
    %25 = vector.load %arg13[%c0_13, %c0_14] : memref<128x1xf32, #tpu.memory_space<vmem>>, vector<128x1xf32>
    %26 = arith.mulf %21, %25 : vector<128x1xf32>
    %cst_15 = arith.constant dense<0.000000e+00> : vector<128xf32>
    %27 = vector.multi_reduction <add>, %24, %cst_15 [1] : vector<128x128xf32> to vector<128xf32>
    %28 = vector.shape_cast %27 : vector<128xf32> to vector<128x1xf32>
    %29 = arith.addf %26, %28 : vector<128x1xf32>
    %c0_16 = arith.constant 0 : index
    %c0_17 = arith.constant 0 : index
    %30 = vector.load %arg13[%c0_16, %c0_17] : memref<128x1xf32, #tpu.memory_space<vmem>>, vector<128x1xf32>
    tpu.vector_store %arg13[%c0_16, %c0_17], %29 {strides = array<i32>} : memref<128x1xf32, #tpu.memory_space<vmem>>, vector<128x1xf32>,
    %c0_18 = arith.constant 0 : index
    %c0_19 = arith.constant 0 : index
    %31 = vector.load %arg14[%c0_18, %c0_19] : memref<128x16xf32, #tpu.memory_space<vmem>>, vector<128x16xf32>
    %32 = vector.broadcast %21 : vector<128x1xf32> to vector<128x16xf32>
    %33 = arith.mulf %32, %31 : vector<128x16xf32>
    %34 = arith.truncf %24 : vector<128x128xf32> to vector<128x128xbf16>
    %cst_20 = arith.constant dense<0.000000e+00> : vector<128x16xf32>
    %35 = tpu.matmul %34, %11, %cst_20 {dimension_numbers = #tpu.dot_dimension_numbers<[1], [0], [0], [1], [0, 0, 1, 1], [], []>} : vector<128x128xbf16>, vector<128x16xbf16>, vector<128x16xf32> -> vector<128x16xf32>
    %36 = arith.addf %33, %35 : vector<128x16xf32>
    %c0_21 = arith.constant 0 : index
    %c0_22 = arith.constant 0 : index
    %37 = vector.load %arg14[%c0_21, %c0_22] : memref<128x16xf32, #tpu.memory_space<vmem>>, vector<128x16xf32>
    tpu.vector_store %arg14[%c0_21, %c0_22], %36 {strides = array<i32>} : memref<128x16xf32, #tpu.memory_space<vmem>>, vector<128x16xf32>,
    %c0_23 = arith.constant 0 : index
    %c0_24 = arith.constant 0 : index
    %38 = vector.load %arg12[%c0_23, %c0_24] : memref<128x1xf32, #tpu.memory_space<vmem>>, vector<128x1xf32>
    tpu.vector_store %arg12[%c0_23, %c0_24], %19 {strides = array<i32>} : memref<128x1xf32, #tpu.memory_space<vmem>>, vector<128x1xf32>,
    %c1_i32 = arith.constant 1 : i32
    %39 = arith.cmpi eq, %arg2, %c1_i32 : i32
    %40 = arith.extui %39 : i1 to i32
    %c0_i32_25 = arith.constant 0 : i32
    %41 = arith.cmpi ne, %40, %c0_i32_25 : i32
    scf.if %41 {
      %c0_26 = arith.constant 0 : index
      %c0_27 = arith.constant 0 : index
      %42 = vector.load %arg14[%c0_26, %c0_27] : memref<128x16xf32, #tpu.memory_space<vmem>>, vector<128x16xf32>
      %c0_28 = arith.constant 0 : index
      %c0_29 = arith.constant 0 : index
      %43 = vector.load %arg13[%c0_28, %c0_29] : memref<128x1xf32, #tpu.memory_space<vmem>>, vector<128x1xf32>
      %44 = tpu.reciprocal %43 {approx = true} : vector<128x1xf32> -> vector<128x1xf32>
      %45 = vector.broadcast %44 : vector<128x1xf32> to vector<128x16xf32>
      %46 = arith.mulf %42, %45 : vector<128x16xf32>
      %c0_30 = arith.constant 0 : index
      %47 = memref.load %arg9[%c0_30] : memref<1xf32, #tpu.memory_space<smem>>
      %48 = vector.broadcast %47 : f32 to vector<128x16xf32>
      %49 = arith.mulf %48, %46 : vector<128x16xf32>
      %c0_31 = arith.constant 0 : index
      %c0_32 = arith.constant 0 : index
      %c0_33 = arith.constant 0 : index
      %50 = vector.load %arg3[%c0_31, %c0_32, %c0_33] : memref<1x128x16xbf16, #tpu.memory_space<vmem>>, vector<1x128x16xbf16>
      %51 = vector.shape_cast %50 : vector<1x128x16xbf16> to vector<128x16xbf16>
      %52 = arith.extf %51 : vector<128x16xbf16> to vector<128x16xf32>
      %53 = arith.addf %49, %52 : vector<128x16xf32>
      %c0_34 = arith.constant 0 : index
      %c0_35 = arith.constant 0 : index
      %c0_36 = arith.constant 0 : index
      %54 = vector.load %arg10[%c0_34, %c0_35, %c0_36] : memref<1x128x16xf32, #tpu.memory_space<vmem>>, vector<1x128x16xf32>
      %55 = vector.shape_cast %54 : vector<1x128x16xf32> to vector<128x16xf32>
      %56 = vector.shape_cast %53 : vector<128x16xf32> to vector<1x128x16xf32>
      tpu.vector_store %arg10[%c0_34, %c0_35, %c0_36], %56 {strides = array<i32>} : memref<1x128x16xf32, #tpu.memory_space<vmem>>, vector<1x128x16xf32>,
    } else {
    }
    return
  }
  func.func @transform_0(%arg0: i32, %arg1: i32, %arg2: i32) -> (i32, i32, i32) {
    %c0_i32 = arith.constant 0 : i32
    %c0_i32_0 = arith.constant 0 : i32
    return %arg0, %arg1, %c0_i32 : i32, i32, i32
  }
  func.func @transform_1(%arg0: i32, %arg1: i32, %arg2: i32) -> (i32, i32, i32) {
    %c0_i32 = arith.constant 0 : i32
    %c0_i32_0 = arith.constant 0 : i32
    return %arg0, %arg2, %c0_i32 : i32, i32, i32
  }
  func.func @transform_2(%arg0: i32, %arg1: i32, %arg2: i32) -> (i32, i32) {
    %c0_i32 = arith.constant 0 : i32
    %c0_i32_0 = arith.constant 0 : i32
    %c0_i32_1 = arith.constant 0 : i32
    return %c0_i32, %c0_i32_0 : i32, i32
  }
  func.func @transform_3(%arg0: i32, %arg1: i32, %arg2: i32) -> (i32, i32) {
    %c0_i32 = arith.constant 0 : i32
    %c0_i32_0 = arith.constant 0 : i32
    %c0_i32_1 = arith.constant 0 : i32
    return %c0_i32, %c0_i32_0 : i32, i32
  }
  func.func @transform_4(%arg0: i32, %arg1: i32, %arg2: i32) -> (i32, i32) {
    %c0_i32 = arith.constant 0 : i32
    %c0_i32_0 = arith.constant 0 : i32
    %c0_i32_1 = arith.constant 0 : i32
    return %c0_i32, %c0_i32_0 : i32, i32
  }
  func.func @transform_5(%arg0: i32, %arg1: i32, %arg2: i32) -> (i32, i32) {
    %c0_i32 = arith.constant 0 : i32
    %c0_i32_0 = arith.constant 0 : i32
    %c0_i32_1 = arith.constant 0 : i32
    return %c0_i32, %c0_i32_0 : i32, i32
  }
  func.func @transform_6(%arg0: i32, %arg1: i32, %arg2: i32) -> i32 {
    %c0_i32 = arith.constant 0 : i32
    %c0_i32_0 = arith.constant 0 : i32
    return %c0_i32 : i32
  }
  func.func @transform_7(%arg0: i32, %arg1: i32, %arg2: i32) -> (i32, i32, i32) {
    %c0_i32 = arith.constant 0 : i32
    %c0_i32_0 = arith.constant 0 : i32
    return %arg0, %arg1, %c0_i32 : i32, i32, i32
  }
}

</mosaic_0001>

<llo_original>
// kernel: tpu_custom_call.1
$region0: #{tpu_custom_call.1}
  #allocation0 [shape = 'u32[]', space=smem, size = 0x4, offset = 0x4, fixed_abs, tag = 'smem constant byte address 0x4 - core index']
  #allocation1 [shape = 'u32[72,128]{1,0:T(1,128)}', space=vmem, size = 0x9000, scoped, tag = 'internal scratch']
  #allocation2 [shape = 'bf16[128,2]{1,0:T(8,128)(2,1)}', space=vmem, size = 0x8000, scoped, tag = 'scratch operand']
  #allocation3 [shape = 'f32[128,1]{1,0:T(8,128)}', space=vmem, size = 0x10000, scoped, tag = 'scratch operand']
  #allocation4 [shape = 'f32[128,1]{1,0:T(8,128)}', space=vmem, size = 0x10000, scoped, tag = 'scratch operand']
  #allocation5 [shape = 'f32[128,16]{1,0:T(8,128)}', space=vmem, size = 0x10000, scoped, tag = 'scratch operand']
  #allocation6 [shape = 'f32[1]{0:T(128)S(6)}', space=smem, size = 0x200, scoped, tag = 'scoped memory for tpu_custom_call.1']
  %s0 = inlined_call_operand.vmem [shape: bf16[2,256,16], index: 0, kind: input, shape index: {}]
  %s1 = inlined_call_operand.vmem [shape: bf16[2,256,16], index: 1, kind: input, shape index: {}]
  %s2 = inlined_call_operand.vmem [shape: bf16[16,2], index: 2, kind: input, shape index: {}]
  %s3 = inlined_call_operand.vmem [shape: f32[1,2], index: 3, kind: input, shape index: {}]
  %s4 = inlined_call_operand.vmem [shape: bf16[16,18], index: 4, kind: input, shape index: {}]
  %s5 = inlined_call_operand.vmem [shape: f32[1,18], index: 5, kind: input, shape index: {}]
  %s6 = inlined_call_operand.<no memory space> [shape: f32[1], index: 6, kind: input, shape index: {}]
  %s7 = inlined_call_operand.vmem [shape: f32[2,256,16], index: 7, kind: output, shape index: {}]
  %s8 = sld [smem:[#allocation0]]
  $region69: #{tpu_custom_call.1} parent=0
    _
  %s10 = ssub.s32 1, %s8
  %s11 = scalar_select 0, %s10, %s8
  %12 = sst [smem:[#allocation6]] %s6
  loop: start=0, step=1, limit=10
  $region2: #{tpu_custom_call.1} parent=0 // loop_pre_header
    _
  $region3: #{tpu_custom_call.1} parent=0 // loop_header
    %s14 = sphi 0, %s18
    %p15 = scmp.ge.s32.totalorder %s14, 10
    %s21 = sphi 0, %s40
    %s22 = sphi 0, %s36
    %s23 = sphi 0, %s32
    %s24 = sphi 0, %s21
    %s25 = sphi 0, %s22
    %s26 = sphi 0, %s23
    %s27 = sphi 0, %s24
    %s28 = sphi 0, %s25
    %s29 = sphi 0, %s26
    %s45 = sphi 0, %s47
    %s48 = sphi 0, %s45
    %s49 = sphi 0, %s48
    %s65 = sphi 0, %s49
    %s73 = sphi 0, %s75
    %s76 = sphi 0, %s73
    %s77 = sphi 0, %s76
    %s93 = sphi 0, %s77
    %s97 = sphi 0, %s97
    %s99 = sphi 0, %s97
    %s100 = sphi 0, %s99
    %s114 = sphi 0, %s100
    %s118 = sphi 0, %s118
    %s120 = sphi 0, %s118
    %s121 = sphi 0, %s120
    %s135 = sphi 0, %s121
    %s139 = sphi 0, %s139
    %s141 = sphi 0, %s139
    %s142 = sphi 0, %s141
    %s156 = sphi 0, %s142
    %s160 = sphi 0, %s160
    %s162 = sphi 0, %s160
    %s163 = sphi 0, %s162
    %s177 = sphi 0, %s163
    %s181 = sphi 0, %s181
    %s183 = sphi 0, %s181
    %s184 = sphi 0, %s183
    %s198 = sphi 0, %s184
    %s206 = sphi 0, %s208
    %s209 = sphi 0, %s206
    %s210 = sphi 0, %s209
    %s226 = sphi 0, %s210
  $region4: #{tpu_custom_call.1} parent=0 // loop_header_branch
    %17 = sbr.rel (%p15) target = $region8
  $region5: #{tpu_custom_call.1} parent=0 // loop_body
    %s19 = ssub.s32 %s14, 1
    %s20 = ssub.s32 %s14, 2
    %s30 = sadd.s32 1, %s23
    %p31 = scmp.ge.s32.totalorder %s30, 2
    %s32 = scalar_select %p31, 0, %s30
    %s33 = sadd.s32 1, %s22
    %s34 = scalar_select %p31, %s33, %s22
    %p35 = scmp.ge.s32.totalorder %s34, 2
    %s36 = scalar_select %p35, 0, %s34
    %s37 = sadd.s32 1, %s21
    %s38 = scalar_select %p35, %s37, %s21
    %p39 = scmp.ge.s32.totalorder %s38, 2
    %s40 = scalar_select %p39, 0, %s38
    %s41 = ssub.s32 %s21, %s40
    %s42 = ssub.s32 %s22, %s36
    %s43 = sor.u32 %s41, %s42
    %p44 = scmp.eq.s32.totalorder %s43, 0
    %s46 = sadd.s32 %s45, 1
    %s47 = scalar_select %p44, %s45, %s46
    %p50 = pneg %p44
    %p51 = scmp.eq.s32.totalorder %s14, 7
    %p52 = por %p50, %p51
    %p53 = scmp.ne.s32.totalorder %s45, %s48
    %p54 = scmp.eq.s32.totalorder %s14, 0
    %p55 = por %p53, %p54
    %p56 = scmp.ne.s32.totalorder %s45, %s48
    %p57 = scmp.eq.s32.totalorder %s19, 7
    %p58 = por %p56, %p57
    %p59 = scmp.ne.s32.totalorder %s48, %s49
    %p60 = scmp.eq.s32.totalorder %s19, 0
    %p61 = por %p59, %p60
    %p62 = scmp.ne.s32.totalorder %s48, %s49
    %p63 = scmp.eq.s32.totalorder %s20, 7
    %p64 = por %p62, %p63
    %p66 = scmp.ne.s32.totalorder %s49, %s65
    %p67 = scmp.eq.s32.totalorder %s20, 0
    %p68 = por %p66, %p67
    %s69 = ssub.s32 %s21, %s40
    %s70 = ssub.s32 %s23, %s32
    %s71 = sor.u32 %s69, %s70
    %p72 = scmp.eq.s32.totalorder %s71, 0
    %s74 = sadd.s32 %s73, 1
    %s75 = scalar_select %p72, %s73, %s74
    %p78 = pneg %p72
    %p79 = scmp.eq.s32.totalorder %s14, 7
    %p80 = por %p78, %p79
    %p81 = scmp.ne.s32.totalorder %s73, %s76
    %p82 = scmp.eq.s32.totalorder %s14, 0
    %p83 = por %p81, %p82
    %p84 = scmp.ne.s32.totalorder %s73, %s76
    %p85 = scmp.eq.s32.totalorder %s19, 7
    %p86 = por %p84, %p85
    %p87 = scmp.ne.s32.totalorder %s76, %s77
    %p88 = scmp.eq.s32.totalorder %s19, 0
    %p89 = por %p87, %p88
    %p90 = scmp.ne.s32.totalorder %s76, %s77
    %p91 = scmp.eq.s32.totalorder %s20, 7
    %p92 = por %p90, %p91
    %p94 = scmp.ne.s32.totalorder %s77, %s93
    %p95 = scmp.eq.s32.totalorder %s20, 0
    %p96 = por %p94, %p95
    %s98 = sadd.s32 %s97, 1
    %p101 = scmp.eq.s32.totalorder %s14, 7
    %p102 = scmp.ne.s32.totalorder %s97, %s99
    %p103 = scmp.eq.s32.totalorder %s14, 0
    %p104 = por %p102, %p103
    %p105 = scmp.ne.s32.totalorder %s97, %s99
    %p106 = scmp.eq.s32.totalorder %s19, 7
    %p107 = por %p105, %p106
    %p108 = scmp.ne.s32.totalorder %s99, %s100
    %p109 = scmp.eq.s32.totalorder %s19, 0
    %p110 = por %p108, %p109
    %p111 = scmp.ne.s32.totalorder %s99, %s100
    %p112 = scmp.eq.s32.totalorder %s20, 7
    %p113 = por %p111, %p112
    %p115 = scmp.ne.s32.totalorder %s100, %s114
    %p116 = scmp.eq.s32.totalorder %s20, 0
    %p117 = por %p115, %p116
    %s119 = sadd.s32 %s118, 1
    %p122 = scmp.eq.s32.totalorder %s14, 7
    %p123 = scmp.ne.s32.totalorder %s118, %s120
    %p124 = scmp.eq.s32.totalorder %s14, 0
    %p125 = por %p123, %p124
    %p126 = scmp.ne.s32.totalorder %s118, %s120
    %p127 = scmp.eq.s32.totalorder %s19, 7
    %p128 = por %p126, %p127
    %p129 = scmp.ne.s32.totalorder %s120, %s121
    %p130 = scmp.eq.s32.totalorder %s19, 0
    %p131 = por %p129, %p130
    %p132 = scmp.ne.s32.totalorder %s120, %s121
    %p133 = scmp.eq.s32.totalorder %s20, 7
    %p134 = por %p132, %p133
    %p136 = scmp.ne.s32.totalorder %s121, %s135
    %p137 = scmp.eq.s32.totalorder %s20, 0
    %p138 = por %p136, %p137
    %s140 = sadd.s32 %s139, 1
    %p143 = scmp.eq.s32.totalorder %s14, 7
    %p144 = scmp.ne.s32.totalorder %s139, %s141
    %p145 = scmp.eq.s32.totalorder %s14, 0
    %p146 = por %p144, %p145
    %p147 = scmp.ne.s32.totalorder %s139, %s141
    %p148 = scmp.eq.s32.totalorder %s19, 7
    %p149 = por %p147, %p148
    %p150 = scmp.ne.s32.totalorder %s141, %s142
    %p151 = scmp.eq.s32.totalorder %s19, 0
    %p152 = por %p150, %p151
    %p153 = scmp.ne.s32.totalorder %s141, %s142
    %p154 = scmp.eq.s32.totalorder %s20, 7
    %p155 = por %p153, %p154
    %p157 = scmp.ne.s32.totalorder %s142, %s156
    %p158 = scmp.eq.s32.totalorder %s20, 0
    %p159 = por %p157, %p158
    %s161 = sadd.s32 %s160, 1
    %p164 = scmp.eq.s32.totalorder %s14, 7
    %p165 = scmp.ne.s32.totalorder %s160, %s162
    %p166 = scmp.eq.s32.totalorder %s14, 0
    %p167 = por %p165, %p166
    %p168 = scmp.ne.s32.totalorder %s160, %s162
    %p169 = scmp.eq.s32.totalorder %s19, 7
    %p170 = por %p168, %p169
    %p171 = scmp.ne.s32.totalorder %s162, %s163
    %p172 = scmp.eq.s32.totalorder %s19, 0
    %p173 = por %p171, %p172
    %p174 = scmp.ne.s32.totalorder %s162, %s163
    %p175 = scmp.eq.s32.totalorder %s20, 7
    %p176 = por %p174, %p175
    %p178 = scmp.ne.s32.totalorder %s163, %s177
    %p179 = scmp.eq.s32.totalorder %s20, 0
    %p180 = por %p178, %p179
    %s182 = sadd.s32 %s181, 1
    %p185 = scmp.eq.s32.totalorder %s14, 7
    %p186 = scmp.ne.s32.totalorder %s181, %s183
    %p187 = scmp.eq.s32.totalorder %s14, 0
    %p188 = por %p186, %p187
    %p189 = scmp.ne.s32.totalorder %s181, %s183
    %p190 = scmp.eq.s32.totalorder %s19, 7
    %p191 = por %p189, %p190
    %p192 = scmp.ne.s32.totalorder %s183, %s184
    %p193 = scmp.eq.s32.totalorder %s19, 0
    %p194 = por %p192, %p193
    %p195 = scmp.ne.s32.totalorder %s183, %s184
    %p196 = scmp.eq.s32.totalorder %s20, 7
    %p197 = por %p195, %p196
    %p199 = scmp.ne.s32.totalorder %s184, %s198
    %p200 = scmp.eq.s32.totalorder %s20, 0
    %p201 = por %p199, %p200
    %s202 = ssub.s32 %s21, %s40
    %s203 = ssub.s32 %s22, %s36
    %s204 = sor.u32 %s202, %s203
    %p205 = scmp.eq.s32.totalorder %s204, 0
    %s207 = sadd.s32 %s206, 1
    %s208 = scalar_select %p205, %s206, %s207
    %p211 = pneg %p205
    %p212 = scmp.eq.s32.totalorder %s14, 7
    %p213 = por %p211, %p212
    %p214 = scmp.ne.s32.totalorder %s206, %s209
    %p215 = scmp.eq.s32.totalorder %s14, 0
    %p216 = por %p214, %p215
    %p217 = scmp.ne.s32.totalorder %s206, %s209
    %p218 = scmp.eq.s32.totalorder %s19, 7
    %p219 = por %p217, %p218
    %p220 = scmp.ne.s32.totalorder %s209, %s210
    %p221 = scmp.eq.s32.totalorder %s19, 0
    %p222 = por %p220, %p221
    %p223 = scmp.ne.s32.totalorder %s209, %s210
    %p224 = scmp.eq.s32.totalorder %s20, 7
    %p225 = por %p223, %p224
    %p227 = scmp.ne.s32.totalorder %s210, %s226
    %p228 = scmp.eq.s32.totalorder %s20, 0
    %p229 = por %p227, %p228
    %p230 = scmp.le.s32.totalorder 1, %s14
    %p231 = scmp.lt.s32.totalorder %s14, 9
    %p232 = pnand %p230, %p231
    %p233 = pneg %p232
    // Predicated region
    $region9: #{tpu_custom_call.1} parent=5 // pred_check
      _
    $region10: #{tpu_custom_call.1} parent=5 // pred_check_branch
      %235 = sbr.rel (%p232) target = $region12
    $region11: #{tpu_custom_call.1} parent=5 // pred_region
      %s236 = ssub.s32 %s14, 1
      // Predicated region
      $region13: #{tpu_custom_call.1} parent=11 // pred_check
        %p237 = pneg %p110
      $region14: #{tpu_custom_call.1} parent=11 // pred_check_branch
        %239 = sbr.rel (%p237) target = $region16
      $region15: #{tpu_custom_call.1} parent=11 // pred_region
        _
      $region16: #{tpu_custom_call.1} parent=11 // pred_fallthru
        _
      // Predicated region
      $region17: #{tpu_custom_call.1} parent=11 // pred_check
        %p240 = pneg %p131
      $region18: #{tpu_custom_call.1} parent=11 // pred_check_branch
        %242 = sbr.rel (%p240) target = $region20
      $region19: #{tpu_custom_call.1} parent=11 // pred_region
        _
      $region20: #{tpu_custom_call.1} parent=11 // pred_fallthru
        _
      // Predicated region
      $region21: #{tpu_custom_call.1} parent=11 // pred_check
        %p243 = pneg %p152
      $region22: #{tpu_custom_call.1} parent=11 // pred_check_branch
        %245 = sbr.rel (%p243) target = $region24
      $region23: #{tpu_custom_call.1} parent=11 // pred_region
        _
      $region24: #{tpu_custom_call.1} parent=11 // pred_fallthru
        _
      // Predicated region
      $region25: #{tpu_custom_call.1} parent=11 // pred_check
        %p246 = pneg %p173
      $region26: #{tpu_custom_call.1} parent=11 // pred_check_branch
        %248 = sbr.rel (%p246) target = $region28
      $region27: #{tpu_custom_call.1} parent=11 // pred_region
        _
      $region28: #{tpu_custom_call.1} parent=11 // pred_fallthru
        _
      // Predicated region
      $region29: #{tpu_custom_call.1} parent=11 // pred_check
        %p249 = pneg %p194
      $region30: #{tpu_custom_call.1} parent=11 // pred_check_branch
        %251 = sbr.rel (%p249) target = $region32
      $region31: #{tpu_custom_call.1} parent=11 // pred_region
        _
      $region32: #{tpu_custom_call.1} parent=11 // pred_fallthru
        _
    $region12: #{tpu_custom_call.1} parent=5 // pred_fallthru
      _
    %p252 = scmp.lt.s32.totalorder %s14, 8
    // Predicated region
    $region33: #{tpu_custom_call.1} parent=5 // pred_check
      %p253 = pneg %p252
    $region34: #{tpu_custom_call.1} parent=5 // pred_check_branch
      %255 = sbr.rel (%p253) target = $region36
    $region35: #{tpu_custom_call.1} parent=5 // pred_region
      // Predicated region
      $region37: #{tpu_custom_call.1} parent=35 // pred_check
        %p256 = pneg %p55
      $region38: #{tpu_custom_call.1} parent=35 // pred_check_branch
        %258 = sbr.rel (%p256) target = $region40
      $region39: #{tpu_custom_call.1} parent=35 // pred_region
        %s259 = smul.u32 16, %s22
        %p260 = scmp.lt.s32.totalorder %s21, 1
        %s261 = scalar_select %p260, %s21, 1
        %p262 = scmp.lt.s32.totalorder %s259, 31
        %s263 = scalar_select %p262, %s259, 31
        %s264 = smul.addr %s261, 32
        %s265 = sadd.s32 %s263, %s264
        %s266 = smul.addr %s265, 4
        %s267 = scalar_lea.vmem %s0, %s266
        %s268 = smul.u32 16, %s22
      $region40: #{tpu_custom_call.1} parent=35 // pred_fallthru
        _
      // Predicated region
      $region41: #{tpu_custom_call.1} parent=35 // pred_check
        %p269 = pneg %p83
      $region42: #{tpu_custom_call.1} parent=35 // pred_check_branch
        %271 = sbr.rel (%p269) target = $region44
      $region43: #{tpu_custom_call.1} parent=35 // pred_region
        %s272 = smul.u32 16, %s23
        %p273 = scmp.lt.s32.totalorder %s21, 1
        %s274 = scalar_select %p273, %s21, 1
        %p275 = scmp.lt.s32.totalorder %s272, 31
        %s276 = scalar_select %p275, %s272, 31
        %s277 = smul.addr %s274, 32
        %s278 = sadd.s32 %s276, %s277
        %s279 = smul.addr %s278, 4
        %s280 = scalar_lea.vmem %s1, %s279
        %s281 = smul.u32 16, %s23
      $region44: #{tpu_custom_call.1} parent=35 // pred_fallthru
        _
    $region36: #{tpu_custom_call.1} parent=5 // pred_fallthru
      _
    %p282 = scmp.le.s32.totalorder 1, %s14
    %p283 = scmp.lt.s32.totalorder %s14, 9
    %p284 = pnand %p282, %p283
    %p285 = pneg %p284
    // Predicated region
    $region45: #{tpu_custom_call.1} parent=5 // pred_check
      _
    $region46: #{tpu_custom_call.1} parent=5 // pred_check_branch
      %287 = sbr.rel (%p284) target = $region48
    $region47: #{tpu_custom_call.1} parent=5 // pred_region
      %s288 = ssub.s32 %s14, 1
      %s289 = smul.u32 16, %s25
      %p290 = scmp.lt.s32.totalorder %s24, 1
      %s291 = scalar_select %p290, %s24, 1
      %p292 = scmp.lt.s32.totalorder %s289, 31
      %s293 = scalar_select %p292, %s289, 31
      %s294 = smul.addr %s291, 32
      %s295 = sadd.s32 %s293, %s294
      %s296 = smul.addr %s295, 4
      %s297 = scalar_lea.vmem %s0, %s296
      %p298 = pneg %p61
      %p299 = pneg %p58
      %s300 = smul.u32 16, %s26
      %p301 = scmp.lt.s32.totalorder %s24, 1
      %s302 = scalar_select %p301, %s24, 1
      %p303 = scmp.lt.s32.totalorder %s300, 31
      %s304 = scalar_select %p303, %s300, 31
      %s305 = smul.addr %s302, 32
      %s306 = sadd.s32 %s304, %s305
      %s307 = smul.addr %s306, 4
      %s308 = scalar_lea.vmem %s1, %s307
      %p309 = pneg %p89
      %p310 = pneg %p86
      %p311 = pneg %p110
      %p312 = pneg %p107
      %p313 = pneg %p131
      %p314 = pneg %p128
      %p315 = pneg %p152
      %p316 = pneg %p149
      %p317 = pneg %p173
      %p318 = pneg %p170
      %p319 = pneg %p194
      %p320 = pneg %p191
      %p321 = pneg %p222
      %p322 = pneg %p219
      %s323 = smul.u32 16, %s25
      %p324 = scmp.lt.s32.totalorder %s24, 1
      %s325 = scalar_select %p324, %s24, 1
      %p326 = scmp.lt.s32.totalorder %s323, 31
      %s327 = scalar_select %p326, %s323, 31
      %s328 = smul.addr %s325, 32
      %s329 = sadd.s32 %s327, %s328
      %s330 = smul.addr %s329, 8
      %s331 = scalar_lea.vmem %s7, %s330
      %s332 = smul.u32 16, %s25
      %p333 = scmp.lt.s32.totalorder %s24, 1
      %s334 = scalar_select %p333, %s24, 1
      %p335 = scmp.lt.s32.totalorder %s332, 31
      %s336 = scalar_select %p335, %s332, 31
      %s337 = smul.addr %s334, 32
      %s338 = sadd.s32 %s336, %s337
      %s339 = smul.addr %s338, 4
      %s340 = scalar_lea.vmem %s0, %s339
      %s341 = smul.u32 16, %s25
      %s342 = smul.u32 16, %s26
      %p343 = scmp.lt.s32.totalorder %s24, 1
      %s344 = scalar_select %p343, %s24, 1
      %p345 = scmp.lt.s32.totalorder %s342, 31
      %s346 = scalar_select %p345, %s342, 31
      %s347 = smul.addr %s344, 32
      %s348 = sadd.s32 %s346, %s347
      %s349 = smul.addr %s348, 4
      %s350 = scalar_lea.vmem %s1, %s349
      %s351 = smul.u32 16, %s26
      %s352 = smul.u32 16, %s25
      %p353 = scmp.lt.s32.totalorder %s24, 1
      %s354 = scalar_select %p353, %s24, 1
      %p355 = scmp.lt.s32.totalorder %s352, 31
      %s356 = scalar_select %p355, %s352, 31
      %s357 = smul.addr %s354, 32
      %s358 = sadd.s32 %s356, %s357
      %s359 = smul.addr %s358, 8
      %s360 = scalar_lea.vmem %s7, %s359
      %s361 = smul.u32 16, %s25
      %p363 = scmp.eq.s32.totalorder %s26, 0
      // Predicated region
      $region49: #{tpu_custom_call.1} parent=47 // pred_check
        %p364 = pneg %p363
      $region50: #{tpu_custom_call.1} parent=47 // pred_check_branch
        %366 = sbr.rel (%p364) target = $region52
      $region51: #{tpu_custom_call.1} parent=47 // pred_region
        %v367 = vld [vmem:[%s340] sm:$0xf]
        %v368 = vld [vmem:[%s340 + $0x4] sm:$0xf]
        %v369 = vld [vmem:[%s340 + $0x8] sm:$0xf]
        %v370 = vld [vmem:[%s340 + $0xc] sm:$0xf]
        %v371 = vld [vmem:[%s340 + $0x10] sm:$0xf]
        %v372 = vld [vmem:[%s340 + $0x14] sm:$0xf]
        %v373 = vld [vmem:[%s340 + $0x18] sm:$0xf]
        %v374 = vld [vmem:[%s340 + $0x1c] sm:$0xf]
        %v375 = vld [vmem:[%s340 + $0x20] sm:$0xf]
        %v376 = vld [vmem:[%s340 + $0x24] sm:$0xf]
        %v377 = vld [vmem:[%s340 + $0x28] sm:$0xf]
        %v378 = vld [vmem:[%s340 + $0x2c] sm:$0xf]
        %v379 = vld [vmem:[%s340 + $0x30] sm:$0xf]
        %v380 = vld [vmem:[%s340 + $0x34] sm:$0xf]
        %v381 = vld [vmem:[%s340 + $0x38] sm:$0xf]
        %v382 = vld [vmem:[%s340 + $0x3c] sm:$0xf]
        %v383 = vld [vmem:[%s2] sm:$0xf]
        %v384 = vld [vmem:[%s2 + $0x4] sm:$0xf]
        %v385 = vld [vmem:[%s3] sm:$0x1]
        %v387 = vperm.slane %v385, 0
        %v405 = vunpack.c.l.b16 %v367
        %v406 = vunpack.c.l.b16 %v368
        %v407 = vunpack.c.l.b16 %v369
        %v408 = vunpack.c.l.b16 %v370
        %v409 = vunpack.c.l.b16 %v371
        %v410 = vunpack.c.l.b16 %v372
        %v411 = vunpack.c.l.b16 %v373
        %v412 = vunpack.c.l.b16 %v374
        %v413 = vunpack.c.l.b16 %v375
        %v414 = vunpack.c.l.b16 %v376
        %v415 = vunpack.c.l.b16 %v377
        %v416 = vunpack.c.l.b16 %v378
        %v417 = vunpack.c.l.b16 %v379
        %v418 = vunpack.c.l.b16 %v380
        %v419 = vunpack.c.l.b16 %v381
        %v420 = vunpack.c.l.b16 %v382
        %v421 = vpack.c.b16 %v406, %v405
        %v422 = vpack.c.b16 %v408, %v407
        %v423 = vpack.c.b16 %v410, %v409
        %v424 = vpack.c.b16 %v412, %v411
        %v425 = vpack.c.b16 %v414, %v413
        %v426 = vpack.c.b16 %v416, %v415
        %v427 = vpack.c.b16 %v418, %v417
        %v428 = vpack.c.b16 %v420, %v419
        %v431 = vunpack.c.l.b16 %v383
        %v432 = vunpack.c.l.b16 %v384
        %v433 = vpack.c.b16 %v432, %v431
        %vm435 = vcmask 130048
        %v437 = vsel %vm435, %v421, 0
        %v440 = vsel %vm435, %v422, 0
        %v443 = vsel %vm435, %v423, 0
        %v446 = vsel %vm435, %v424, 0
        %v449 = vsel %vm435, %v425, 0
        %v452 = vsel %vm435, %v426, 0
        %v455 = vsel %vm435, %v427, 0
        %v458 = vsel %vm435, %v428, 0
        %460 = vmatpush.bf16.msra.mxu0 0
        %461 = vmatpush.bf16.msra.mxu0 0
        %462 = vmatpush.bf16.msra.mxu0 0
        %463 = vmatpush.bf16.msra.mxu0 0
        %464 = vmatpush.bf16.msra.mxu0 0
        %465 = vmatpush.bf16.msra.mxu0 0
        %466 = vmatpush.bf16.msra.mxu0 0
        %467 = vmatpush.bf16.msra.mxu0 %v433
        %468 = vmatmul.bf16.gmra.mxu0 %v437
        %v469 = vpop.f32.mrf.mxu0
        %v470 = vadd.f32 %v387, %v469
        %v471 = vpop.f32.mrf.mxu0
        %v472 = vadd.f32 %v387, %v471
        %473 = vmatmul.bf16.gmra.mxu0 %v440
        %v474 = vpop.f32.mrf.mxu0
        %v475 = vadd.f32 %v387, %v474
        %v476 = vpop.f32.mrf.mxu0
        %v477 = vadd.f32 %v387, %v476
        %478 = vmatmul.bf16.gmra.mxu0 %v443
        %v479 = vpop.f32.mrf.mxu0
        %v480 = vadd.f32 %v387, %v479
        %v481 = vpop.f32.mrf.mxu0
        %v482 = vadd.f32 %v387, %v481
        %483 = vmatmul.bf16.gmra.mxu0 %v446
        %v484 = vpop.f32.mrf.mxu0
        %v485 = vadd.f32 %v387, %v484
        %v486 = vpop.f32.mrf.mxu0
        %v487 = vadd.f32 %v387, %v486
        %488 = vmatmul.bf16.gmra.mxu0 %v449
        %v489 = vpop.f32.mrf.mxu0
        %v490 = vadd.f32 %v387, %v489
        %v491 = vpop.f32.mrf.mxu0
        %v492 = vadd.f32 %v387, %v491
        %493 = vmatmul.bf16.gmra.mxu0 %v452
        %v494 = vpop.f32.mrf.mxu0
        %v495 = vadd.f32 %v387, %v494
        %v496 = vpop.f32.mrf.mxu0
        %v497 = vadd.f32 %v387, %v496
        %498 = vmatmul.bf16.gmra.mxu0 %v455
        %v499 = vpop.f32.mrf.mxu0
        %v500 = vadd.f32 %v387, %v499
        %v501 = vpop.f32.mrf.mxu0
        %v502 = vadd.f32 %v387, %v501
        %503 = vmatmul.bf16.gmra.mxu0 %v458
        %v504 = vpop.f32.mrf.mxu0
        %v505 = vadd.f32 %v387, %v504
        %v506 = vpop.f32.mrf.mxu0
        %v507 = vadd.f32 %v387, %v506
        %508 = vdwg.mxu0
        %v509 = vpack.c.bf16 %v470, %v470
        %v510 = vpack.c.bf16 %v472, %v472
        %v511 = vpack.c.bf16 %v475, %v475
        %v512 = vpack.c.bf16 %v477, %v477
        %v513 = vpack.c.bf16 %v480, %v480
        %v514 = vpack.c.bf16 %v482, %v482
        %v515 = vpack.c.bf16 %v485, %v485
        %v516 = vpack.c.bf16 %v487, %v487
        %v517 = vpack.c.bf16 %v490, %v490
        %v518 = vpack.c.bf16 %v492, %v492
        %v519 = vpack.c.bf16 %v495, %v495
        %v520 = vpack.c.bf16 %v497, %v497
        %v521 = vpack.c.bf16 %v500, %v500
        %v522 = vpack.c.bf16 %v502, %v502
        %v523 = vpack.c.bf16 %v505, %v505
        %v524 = vpack.c.bf16 %v507, %v507
        %vm525 = vcmask 11264
        %526 = vst.msk [vmem:[#allocation2] sm:$0xf] %vm525, %v509
        %527 = vst.msk [vmem:[#allocation2 + $0x4] sm:$0xf] %vm525, %v510
        %528 = vst.msk [vmem:[#allocation2 + $0x8] sm:$0xf] %vm525, %v511
        %529 = vst.msk [vmem:[#allocation2 + $0xc] sm:$0xf] %vm525, %v512
        %530 = vst.msk [vmem:[#allocation2 + $0x10] sm:$0xf] %vm525, %v513
        %531 = vst.msk [vmem:[#allocation2 + $0x14] sm:$0xf] %vm525, %v514
        %532 = vst.msk [vmem:[#allocation2 + $0x18] sm:$0xf] %vm525, %v515
        %533 = vst.msk [vmem:[#allocation2 + $0x1c] sm:$0xf] %vm525, %v516
        %534 = vst.msk [vmem:[#allocation2 + $0x20] sm:$0xf] %vm525, %v517
        %535 = vst.msk [vmem:[#allocation2 + $0x24] sm:$0xf] %vm525, %v518
        %536 = vst.msk [vmem:[#allocation2 + $0x28] sm:$0xf] %vm525, %v519
        %537 = vst.msk [vmem:[#allocation2 + $0x2c] sm:$0xf] %vm525, %v520
        %538 = vst.msk [vmem:[#allocation2 + $0x30] sm:$0xf] %vm525, %v521
        %539 = vst.msk [vmem:[#allocation2 + $0x34] sm:$0xf] %vm525, %v522
        %540 = vst.msk [vmem:[#allocation2 + $0x38] sm:$0xf] %vm525, %v523
        %541 = vst.msk [vmem:[#allocation2 + $0x3c] sm:$0xf] %vm525, %v524
        %vm542 = vcmask 7168
        %543 = vst.msk [vmem:[#allocation3] sm:$0xff] %vm542, -inf
        %544 = vst.msk [vmem:[#allocation3 + $0x8] sm:$0xff] %vm542, -inf
        %545 = vst.msk [vmem:[#allocation3 + $0x10] sm:$0xff] %vm542, -inf
        %546 = vst.msk [vmem:[#allocation3 + $0x18] sm:$0xff] %vm542, -inf
        %547 = vst.msk [vmem:[#allocation3 + $0x20] sm:$0xff] %vm542, -inf
        %548 = vst.msk [vmem:[#allocation3 + $0x28] sm:$0xff] %vm542, -inf
        %549 = vst.msk [vmem:[#allocation3 + $0x30] sm:$0xff] %vm542, -inf
        %550 = vst.msk [vmem:[#allocation3 + $0x38] sm:$0xff] %vm542, -inf
        %551 = vst.msk [vmem:[#allocation3 + $0x40] sm:$0xff] %vm542, -inf
        %552 = vst.msk [vmem:[#allocation3 + $0x48] sm:$0xff] %vm542, -inf
        %553 = vst.msk [vmem:[#allocation3 + $0x50] sm:$0xff] %vm542, -inf
        %554 = vst.msk [vmem:[#allocation3 + $0x58] sm:$0xff] %vm542, -inf
        %555 = vst.msk [vmem:[#allocation3 + $0x60] sm:$0xff] %vm542, -inf
        %556 = vst.msk [vmem:[#allocation3 + $0x68] sm:$0xff] %vm542, -inf
        %557 = vst.msk [vmem:[#allocation3 + $0x70] sm:$0xff] %vm542, -inf
        %558 = vst.msk [vmem:[#allocation3 + $0x78] sm:$0xff] %vm542, -inf
        %559 = vst.msk [vmem:[#allocation4] sm:$0xff] %vm542, 0.0
        %560 = vst.msk [vmem:[#allocation4 + $0x8] sm:$0xff] %vm542, 0.0
        %561 = vst.msk [vmem:[#allocation4 + $0x10] sm:$0xff] %vm542, 0.0
        %562 = vst.msk [vmem:[#allocation4 + $0x18] sm:$0xff] %vm542, 0.0
        %563 = vst.msk [vmem:[#allocation4 + $0x20] sm:$0xff] %vm542, 0.0
        %564 = vst.msk [vmem:[#allocation4 + $0x28] sm:$0xff] %vm542, 0.0
        %565 = vst.msk [vmem:[#allocation4 + $0x30] sm:$0xff] %vm542, 0.0
        %566 = vst.msk [vmem:[#allocation4 + $0x38] sm:$0xff] %vm542, 0.0
        %567 = vst.msk [vmem:[#allocation4 + $0x40] sm:$0xff] %vm542, 0.0
        %568 = vst.msk [vmem:[#allocation4 + $0x48] sm:$0xff] %vm542, 0.0
        %569 = vst.msk [vmem:[#allocation4 + $0x50] sm:$0xff] %vm542, 0.0
        %570 = vst.msk [vmem:[#allocation4 + $0x58] sm:$0xff] %vm542, 0.0
        %571 = vst.msk [vmem:[#allocation4 + $0x60] sm:$0xff] %vm542, 0.0
        %572 = vst.msk [vmem:[#allocation4 + $0x68] sm:$0xff] %vm542, 0.0
        %573 = vst.msk [vmem:[#allocation4 + $0x70] sm:$0xff] %vm542, 0.0
        %574 = vst.msk [vmem:[#allocation4 + $0x78] sm:$0xff] %vm542, 0.0
        %575 = vst.msk [vmem:[#allocation5] sm:$0xff] %vm435, 0.0
        %576 = vst.msk [vmem:[#allocation5 + $0x8] sm:$0xff] %vm435, 0.0
        %577 = vst.msk [vmem:[#allocation5 + $0x10] sm:$0xff] %vm435, 0.0
        %578 = vst.msk [vmem:[#allocation5 + $0x18] sm:$0xff] %vm435, 0.0
        %579 = vst.msk [vmem:[#allocation5 + $0x20] sm:$0xff] %vm435, 0.0
        %580 = vst.msk [vmem:[#allocation5 + $0x28] sm:$0xff] %vm435, 0.0
        %581 = vst.msk [vmem:[#allocation5 + $0x30] sm:$0xff] %vm435, 0.0
        %582 = vst.msk [vmem:[#allocation5 + $0x38] sm:$0xff] %vm435, 0.0
        %583 = vst.msk [vmem:[#allocation5 + $0x40] sm:$0xff] %vm435, 0.0
        %584 = vst.msk [vmem:[#allocation5 + $0x48] sm:$0xff] %vm435, 0.0
        %585 = vst.msk [vmem:[#allocation5 + $0x50] sm:$0xff] %vm435, 0.0
        %586 = vst.msk [vmem:[#allocation5 + $0x58] sm:$0xff] %vm435, 0.0
        %587 = vst.msk [vmem:[#allocation5 + $0x60] sm:$0xff] %vm435, 0.0
        %588 = vst.msk [vmem:[#allocation5 + $0x68] sm:$0xff] %vm435, 0.0
        %589 = vst.msk [vmem:[#allocation5 + $0x70] sm:$0xff] %vm435, 0.0
        %590 = vst.msk [vmem:[#allocation5 + $0x78] sm:$0xff] %vm435, 0.0
      $region52: #{tpu_custom_call.1} parent=47 // pred_fallthru
        _
      %v591 = vld [vmem:[%s350] sm:$0xf]
      %v592 = vld [vmem:[%s350 + $0x4] sm:$0xf]
      %v593 = vld [vmem:[%s350 + $0x8] sm:$0xf]
      %v594 = vld [vmem:[%s350 + $0xc] sm:$0xf]
      %v595 = vld [vmem:[%s350 + $0x10] sm:$0xf]
      %v596 = vld [vmem:[%s350 + $0x14] sm:$0xf]
      %v597 = vld [vmem:[%s350 + $0x18] sm:$0xf]
      %v598 = vld [vmem:[%s350 + $0x1c] sm:$0xf]
      %v599 = vld [vmem:[%s350 + $0x20] sm:$0xf]
      %v600 = vld [vmem:[%s350 + $0x24] sm:$0xf]
      %v601 = vld [vmem:[%s350 + $0x28] sm:$0xf]
      %v602 = vld [vmem:[%s350 + $0x2c] sm:$0xf]
      %v603 = vld [vmem:[%s350 + $0x30] sm:$0xf]
      %v604 = vld [vmem:[%s350 + $0x34] sm:$0xf]
      %v605 = vld [vmem:[%s350 + $0x38] sm:$0xf]
      %v606 = vld [vmem:[%s350 + $0x3c] sm:$0xf]
      %v607 = vld [vmem:[%s4] sm:$0xf]
      %v608 = vld [vmem:[%s4 + $0x4] sm:$0xf]
      %v609 = vld [vmem:[%s5] sm:$0x1]
      %v611 = vperm.slane %v609, 0
      %v629 = vunpack.c.l.b16 %v591
      %v630 = vunpack.c.l.b16 %v592
      %v631 = vunpack.c.l.b16 %v593
      %v632 = vunpack.c.l.b16 %v594
      %v633 = vunpack.c.l.b16 %v595
      %v634 = vunpack.c.l.b16 %v596
      %v635 = vunpack.c.l.b16 %v597
      %v636 = vunpack.c.l.b16 %v598
      %v637 = vunpack.c.l.b16 %v599
      %v638 = vunpack.c.l.b16 %v600
      %v639 = vunpack.c.l.b16 %v601
      %v640 = vunpack.c.l.b16 %v602
      %v641 = vunpack.c.l.b16 %v603
      %v642 = vunpack.c.l.b16 %v604
      %v643 = vunpack.c.l.b16 %v605
      %v644 = vunpack.c.l.b16 %v606
      %v645 = vpack.c.b16 %v630, %v629
      %v646 = vpack.c.b16 %v632, %v631
      %v647 = vpack.c.b16 %v634, %v633
      %v648 = vpack.c.b16 %v636, %v635
      %v649 = vpack.c.b16 %v638, %v637
      %v650 = vpack.c.b16 %v640, %v639
      %v651 = vpack.c.b16 %v642, %v641
      %v652 = vpack.c.b16 %v644, %v643
      %v655 = vunpack.c.l.b16 %v607
      %v656 = vunpack.c.l.b16 %v608
      %v657 = vpack.c.b16 %v656, %v655
      %vm659 = vcmask 130048
      %v661 = vsel %vm659, %v645, 0
      %v664 = vsel %vm659, %v646, 0
      %v667 = vsel %vm659, %v647, 0
      %v670 = vsel %vm659, %v648, 0
      %v673 = vsel %vm659, %v649, 0
      %v676 = vsel %vm659, %v650, 0
      %v679 = vsel %vm659, %v651, 0
      %v682 = vsel %vm659, %v652, 0
      %684 = vmatpush.bf16.msra.mxu0 0
      %685 = vmatpush.bf16.msra.mxu0 0
      %686 = vmatpush.bf16.msra.mxu0 0
      %687 = vmatpush.bf16.msra.mxu0 0
      %688 = vmatpush.bf16.msra.mxu0 0
      %689 = vmatpush.bf16.msra.mxu0 0
      %690 = vmatpush.bf16.msra.mxu0 0
      %691 = vmatpush.bf16.msra.mxu0 %v657
      %692 = vmatmul.bf16.gmra.mxu0 %v661
      %v693 = vpop.f32.mrf.mxu0
      %v694 = vadd.f32 %v611, %v693
      %v695 = vpop.f32.mrf.mxu0
      %v696 = vadd.f32 %v611, %v695
      %697 = vmatmul.bf16.gmra.mxu0 %v664
      %v698 = vpop.f32.mrf.mxu0
      %v699 = vadd.f32 %v611, %v698
      %v700 = vpop.f32.mrf.mxu0
      %v701 = vadd.f32 %v611, %v700
      %702 = vmatmul.bf16.gmra.mxu0 %v667
      %v703 = vpop.f32.mrf.mxu0
      %v704 = vadd.f32 %v611, %v703
      %v705 = vpop.f32.mrf.mxu0
      %v706 = vadd.f32 %v611, %v705
      %707 = vmatmul.bf16.gmra.mxu0 %v670
      %v708 = vpop.f32.mrf.mxu0
      %v709 = vadd.f32 %v611, %v708
      %v710 = vpop.f32.mrf.mxu0
      %v711 = vadd.f32 %v611, %v710
      %712 = vmatmul.bf16.gmra.mxu0 %v673
      %v713 = vpop.f32.mrf.mxu0
      %v714 = vadd.f32 %v611, %v713
      %v715 = vpop.f32.mrf.mxu0
      %v716 = vadd.f32 %v611, %v715
      %717 = vmatmul.bf16.gmra.mxu0 %v676
      %v718 = vpop.f32.mrf.mxu0
      %v719 = vadd.f32 %v611, %v718
      %v720 = vpop.f32.mrf.mxu0
      %v721 = vadd.f32 %v611, %v720
      %722 = vmatmul.bf16.gmra.mxu0 %v679
      %v723 = vpop.f32.mrf.mxu0
      %v724 = vadd.f32 %v611, %v723
      %v725 = vpop.f32.mrf.mxu0
      %v726 = vadd.f32 %v611, %v725
      %727 = vmatmul.bf16.gmra.mxu0 %v682
      %v728 = vpop.f32.mrf.mxu0
      %v729 = vadd.f32 %v611, %v728
      %v730 = vpop.f32.mrf.mxu0
      %v731 = vadd.f32 %v611, %v730
      %732 = vdwg.mxu0
      %v733 = vpack.c.bf16 %v696, %v694
      %v734 = vpack.c.bf16 %v701, %v699
      %v735 = vpack.c.bf16 %v706, %v704
      %v736 = vpack.c.bf16 %v711, %v709
      %v737 = vpack.c.bf16 %v716, %v714
      %v738 = vpack.c.bf16 %v721, %v719
      %v739 = vpack.c.bf16 %v726, %v724
      %v740 = vpack.c.bf16 %v731, %v729
      %v741 = vld [vmem:[#allocation2] sm:$0xf]
      %v742 = vld [vmem:[#allocation2 + $0x4] sm:$0xf]
      %v743 = vld [vmem:[#allocation2 + $0x8] sm:$0xf]
      %v744 = vld [vmem:[#allocation2 + $0xc] sm:$0xf]
      %v745 = vld [vmem:[#allocation2 + $0x10] sm:$0xf]
      %v746 = vld [vmem:[#allocation2 + $0x14] sm:$0xf]
      %v747 = vld [vmem:[#allocation2 + $0x18] sm:$0xf]
      %v748 = vld [vmem:[#allocation2 + $0x1c] sm:$0xf]
      %v749 = vld [vmem:[#allocation2 + $0x20] sm:$0xf]
      %v750 = vld [vmem:[#allocation2 + $0x24] sm:$0xf]
      %v751 = vld [vmem:[#allocation2 + $0x28] sm:$0xf]
      %v752 = vld [vmem:[#allocation2 + $0x2c] sm:$0xf]
      %v753 = vld [vmem:[#allocation2 + $0x30] sm:$0xf]
      %v754 = vld [vmem:[#allocation2 + $0x34] sm:$0xf]
      %v755 = vld [vmem:[#allocation2 + $0x38] sm:$0xf]
      %v756 = vld [vmem:[#allocation2 + $0x3c] sm:$0xf]
      %v773 = vunpack.c.l.b16 %v741
      %v774 = vunpack.c.l.b16 %v742
      %v775 = vunpack.c.l.b16 %v743
      %v776 = vunpack.c.l.b16 %v744
      %v777 = vunpack.c.l.b16 %v745
      %v778 = vunpack.c.l.b16 %v746
      %v779 = vunpack.c.l.b16 %v747
      %v780 = vunpack.c.l.b16 %v748
      %v781 = vunpack.c.l.b16 %v749
      %v782 = vunpack.c.l.b16 %v750
      %v783 = vunpack.c.l.b16 %v751
      %v784 = vunpack.c.l.b16 %v752
      %v785 = vunpack.c.l.b16 %v753
      %v786 = vunpack.c.l.b16 %v754
      %v787 = vunpack.c.l.b16 %v755
      %v788 = vunpack.c.l.b16 %v756
      %v789 = vpack.c.b16 %v774, %v773
      %v790 = vpack.c.b16 %v776, %v775
      %v791 = vpack.c.b16 %v778, %v777
      %v792 = vpack.c.b16 %v780, %v779
      %v793 = vpack.c.b16 %v782, %v781
      %v794 = vpack.c.b16 %v784, %v783
      %v795 = vpack.c.b16 %v786, %v785
      %v796 = vpack.c.b16 %v788, %v787
      %805 = vrot.lane.b32.xlu0 %v733, 112
      %v806 = vpop.permute.xlu0 %805
      %807 = vrot.lane.b32.xlu0 %v734, 112
      %v808 = vpop.permute.xlu0 %807
      %809 = vrot.lane.b32.xlu0 %v735, 112
      %v810 = vpop.permute.xlu0 %809
      %811 = vrot.lane.b32.xlu0 %v736, 112
      %v812 = vpop.permute.xlu0 %811
      %813 = vrot.lane.b32.xlu0 %v737, 112
      %v814 = vpop.permute.xlu0 %813
      %815 = vrot.lane.b32.xlu0 %v738, 112
      %v816 = vpop.permute.xlu0 %815
      %817 = vrot.lane.b32.xlu0 %v739, 112
      %v818 = vpop.permute.xlu0 %817
      %819 = vrot.lane.b32.xlu0 %v740, 112
      %v820 = vpop.permute.xlu0 %819
      %vm821 = vcmask 15360
      %v823 = vsel %vm821, %v789, 0
      %v826 = vsel %vm821, %v790, 0
      %v829 = vsel %vm821, %v791, 0
      %v832 = vsel %vm821, %v792, 0
      %v835 = vsel %vm821, %v793, 0
      %v838 = vsel %vm821, %v794, 0
      %v841 = vsel %vm821, %v795, 0
      %v844 = vsel %vm821, %v796, 0
      %v847 = vsel %vm821, %v806, 0
      %v850 = vsel %vm821, %v808, 0
      %v853 = vsel %vm821, %v810, 0
      %v856 = vsel %vm821, %v812, 0
      %v859 = vsel %vm821, %v814, 0
      %v862 = vsel %vm821, %v816, 0
      %v865 = vsel %vm821, %v818, 0
      %v868 = vsel %vm821, %v820, 0
      %870 = vmatpush.bf16.xpose.msra.mxu0 %v868
      %871 = vmatpush.bf16.xpose.msra.mxu0 %v865
      %872 = vmatpush.bf16.xpose.msra.mxu0 %v862
      %873 = vmatpush.bf16.xpose.msra.mxu0 %v859
      %874 = vmatpush.bf16.xpose.msra.mxu0 %v856
      %875 = vmatpush.bf16.xpose.msra.mxu0 %v853
      %876 = vmatpush.bf16.xpose.msra.mxu0 %v850
      %877 = vmatpush.bf16.xpose.msra.mxu0 %v847
      %878 = vmatmul.bf16.gmra.mxu0 %v823
      %v879 = vpop.f32.mrf.mxu0
      %v880 = vadd.f32 0.0, %v879
      %v881 = vpop.f32.mrf.mxu0
      %v882 = vadd.f32 0.0, %v881
      %883 = vmatmul.bf16.gmra.mxu0 %v826
      %v884 = vpop.f32.mrf.mxu0
      %v885 = vadd.f32 0.0, %v884
      %v886 = vpop.f32.mrf.mxu0
      %v887 = vadd.f32 0.0, %v886
      %888 = vmatmul.bf16.gmra.mxu0 %v829
      %v889 = vpop.f32.mrf.mxu0
      %v890 = vadd.f32 0.0, %v889
      %v891 = vpop.f32.mrf.mxu0
      %v892 = vadd.f32 0.0, %v891
      %893 = vmatmul.bf16.gmra.mxu0 %v832
      %v894 = vpop.f32.mrf.mxu0
      %v895 = vadd.f32 0.0, %v894
      %v896 = vpop.f32.mrf.mxu0
      %v897 = vadd.f32 0.0, %v896
      %898 = vmatmul.bf16.gmra.mxu0 %v835
      %v899 = vpop.f32.mrf.mxu0
      %v900 = vadd.f32 0.0, %v899
      %v901 = vpop.f32.mrf.mxu0
      %v902 = vadd.f32 0.0, %v901
      %903 = vmatmul.bf16.gmra.mxu0 %v838
      %v904 = vpop.f32.mrf.mxu0
      %v905 = vadd.f32 0.0, %v904
      %v906 = vpop.f32.mrf.mxu0
      %v907 = vadd.f32 0.0, %v906
      %908 = vmatmul.bf16.gmra.mxu0 %v841
      %v909 = vpop.f32.mrf.mxu0
      %v910 = vadd.f32 0.0, %v909
      %v911 = vpop.f32.mrf.mxu0
      %v912 = vadd.f32 0.0, %v911
      %913 = vmatmul.bf16.gmra.mxu0 %v844
      %v914 = vpop.f32.mrf.mxu0
      %v915 = vadd.f32 0.0, %v914
      %v916 = vpop.f32.mrf.mxu0
      %v917 = vadd.f32 0.0, %v916
      %918 = vdwg.mxu0
      %v919 = vld [vmem:[#allocation3] sm:$0xff]
      %v920 = vld [vmem:[#allocation3 + $0x8] sm:$0xff]
      %v921 = vld [vmem:[#allocation3 + $0x10] sm:$0xff]
      %v922 = vld [vmem:[#allocation3 + $0x18] sm:$0xff]
      %v923 = vld [vmem:[#allocation3 + $0x20] sm:$0xff]
      %v924 = vld [vmem:[#allocation3 + $0x28] sm:$0xff]
      %v925 = vld [vmem:[#allocation3 + $0x30] sm:$0xff]
      %v926 = vld [vmem:[#allocation3 + $0x38] sm:$0xff]
      %v927 = vld [vmem:[#allocation3 + $0x40] sm:$0xff]
      %v928 = vld [vmem:[#allocation3 + $0x48] sm:$0xff]
      %v929 = vld [vmem:[#allocation3 + $0x50] sm:$0xff]
      %v930 = vld [vmem:[#allocation3 + $0x58] sm:$0xff]
      %v931 = vld [vmem:[#allocation3 + $0x60] sm:$0xff]
      %v932 = vld [vmem:[#allocation3 + $0x68] sm:$0xff]
      %v933 = vld [vmem:[#allocation3 + $0x70] sm:$0xff]
      %v934 = vld [vmem:[#allocation3 + $0x78] sm:$0xff]
      %935 = vmax.xlane.f32.xlu0 %v880
      %v936 = vpop.xlane.xlu0 %935
      %937 = vmax.xlane.f32.xlu0 %v882
      %v938 = vpop.xlane.xlu0 %937
      %939 = vmax.xlane.f32.xlu0 %v885
      %v940 = vpop.xlane.xlu0 %939
      %941 = vmax.xlane.f32.xlu0 %v887
      %v942 = vpop.xlane.xlu0 %941
      %943 = vmax.xlane.f32.xlu0 %v890
      %v944 = vpop.xlane.xlu0 %943
      %945 = vmax.xlane.f32.xlu0 %v892
      %v946 = vpop.xlane.xlu0 %945
      %947 = vmax.xlane.f32.xlu0 %v895
      %v948 = vpop.xlane.xlu0 %947
      %949 = vmax.xlane.f32.xlu0 %v897
      %v950 = vpop.xlane.xlu0 %949
      %951 = vmax.xlane.f32.xlu0 %v900
      %v952 = vpop.xlane.xlu0 %951
      %953 = vmax.xlane.f32.xlu0 %v902
      %v954 = vpop.xlane.xlu0 %953
      %955 = vmax.xlane.f32.xlu0 %v905
      %v956 = vpop.xlane.xlu0 %955
      %957 = vmax.xlane.f32.xlu0 %v907
      %v958 = vpop.xlane.xlu0 %957
      %959 = vmax.xlane.f32.xlu0 %v910
      %v960 = vpop.xlane.xlu0 %959
      %961 = vmax.xlane.f32.xlu0 %v912
      %v962 = vpop.xlane.xlu0 %961
      %963 = vmax.xlane.f32.xlu0 %v915
      %v964 = vpop.xlane.xlu0 %963
      %965 = vmax.xlane.f32.xlu0 %v917
      %v966 = vpop.xlane.xlu0 %965
      %v967 = vmax.f32 %v919, %v936
      %v968 = vmax.f32 %v920, %v938
      %v969 = vmax.f32 %v921, %v940
      %v970 = vmax.f32 %v922, %v942
      %v971 = vmax.f32 %v923, %v944
      %v972 = vmax.f32 %v924, %v946
      %v973 = vmax.f32 %v925, %v948
      %v974 = vmax.f32 %v926, %v950
      %v975 = vmax.f32 %v927, %v952
      %v976 = vmax.f32 %v928, %v954
      %v977 = vmax.f32 %v929, %v956
      %v978 = vmax.f32 %v930, %v958
      %v979 = vmax.f32 %v931, %v960
      %v980 = vmax.f32 %v932, %v962
      %v981 = vmax.f32 %v933, %v964
      %v982 = vmax.f32 %v934, %v966
      %v983 = vsub.f32 %v919, %v967
      %v984 = vsub.f32 %v920, %v968
      %v985 = vsub.f32 %v921, %v969
      %v986 = vsub.f32 %v922, %v970
      %v987 = vsub.f32 %v923, %v971
      %v988 = vsub.f32 %v924, %v972
      %v989 = vsub.f32 %v925, %v973
      %v990 = vsub.f32 %v926, %v974
      %v991 = vsub.f32 %v927, %v975
      %v992 = vsub.f32 %v928, %v976
      %v993 = vsub.f32 %v929, %v977
      %v994 = vsub.f32 %v930, %v978
      %v995 = vsub.f32 %v931, %v979
      %v996 = vsub.f32 %v932, %v980
      %v997 = vsub.f32 %v933, %v981
      %v998 = vsub.f32 %v934, %v982
      %v999 = vmul.f32 %v983, 1.442695
      %v1000 = vpow.pop %v999
      %v1001 = vmul.f32 %v984, 1.442695
      %v1002 = vpow.pop %v1001
      %v1003 = vmul.f32 %v985, 1.442695
      %v1004 = vpow.pop %v1003
      %v1005 = vmul.f32 %v986, 1.442695
      %v1006 = vpow.pop %v1005
      %v1007 = vmul.f32 %v987, 1.442695
      %v1008 = vpow.pop %v1007
      %v1009 = vmul.f32 %v988, 1.442695
      %v1010 = vpow.pop %v1009
      %v1011 = vmul.f32 %v989, 1.442695
      %v1012 = vpow.pop %v1011
      %v1013 = vmul.f32 %v990, 1.442695
      %v1014 = vpow.pop %v1013
      %v1015 = vmul.f32 %v991, 1.442695
      %v1016 = vpow.pop %v1015
      %v1017 = vmul.f32 %v992, 1.442695
      %v1018 = vpow.pop %v1017
      %v1019 = vmul.f32 %v993, 1.442695
      %v1020 = vpow.pop %v1019
      %v1021 = vmul.f32 %v994, 1.442695
      %v1022 = vpow.pop %v1021
      %v1023 = vmul.f32 %v995, 1.442695
      %v1024 = vpow.pop %v1023
      %v1025 = vmul.f32 %v996, 1.442695
      %v1026 = vpow.pop %v1025
      %v1027 = vmul.f32 %v997, 1.442695
      %v1028 = vpow.pop %v1027
      %v1029 = vmul.f32 %v998, 1.442695
      %v1030 = vpow.pop %v1029
      %1032 = vset.pattern.permute.xlu0 0
      %1033 = vperm.xlu0 %1032, %v967
      %v1034 = vpop.permute.xlu0 %1033
      %1037 = vset.pattern.permute.xlu0 0
      %1038 = vperm.xlu0 %1037, %v968
      %v1039 = vpop.permute.xlu0 %1038
      %1042 = vset.pattern.permute.xlu0 0
      %1043 = vperm.xlu0 %1042, %v969
      %v1044 = vpop.permute.xlu0 %1043
      %1047 = vset.pattern.permute.xlu0 0
      %1048 = vperm.xlu0 %1047, %v970
      %v1049 = vpop.permute.xlu0 %1048
      %1052 = vset.pattern.permute.xlu0 0
      %1053 = vperm.xlu0 %1052, %v971
      %v1054 = vpop.permute.xlu0 %1053
      %1057 = vset.pattern.permute.xlu0 0
      %1058 = vperm.xlu0 %1057, %v972
      %v1059 = vpop.permute.xlu0 %1058
      %1062 = vset.pattern.permute.xlu0 0
      %1063 = vperm.xlu0 %1062, %v973
      %v1064 = vpop.permute.xlu0 %1063
      %1067 = vset.pattern.permute.xlu0 0
      %1068 = vperm.xlu0 %1067, %v974
      %v1069 = vpop.permute.xlu0 %1068
      %1072 = vset.pattern.permute.xlu0 0
      %1073 = vperm.xlu0 %1072, %v975
      %v1074 = vpop.permute.xlu0 %1073
      %1077 = vset.pattern.permute.xlu0 0
      %1078 = vperm.xlu0 %1077, %v976
      %v1079 = vpop.permute.xlu0 %1078
      %1082 = vset.pattern.permute.xlu0 0
      %1083 = vperm.xlu0 %1082, %v977
      %v1084 = vpop.permute.xlu0 %1083
      %1087 = vset.pattern.permute.xlu0 0
      %1088 = vperm.xlu0 %1087, %v978
      %v1089 = vpop.permute.xlu0 %1088
      %1092 = vset.pattern.permute.xlu0 0
      %1093 = vperm.xlu0 %1092, %v979
      %v1094 = vpop.permute.xlu0 %1093
      %1097 = vset.pattern.permute.xlu0 0
      %1098 = vperm.xlu0 %1097, %v980
      %v1099 = vpop.permute.xlu0 %1098
      %1102 = vset.pattern.permute.xlu0 0
      %1103 = vperm.xlu0 %1102, %v981
      %v1104 = vpop.permute.xlu0 %1103
      %1107 = vset.pattern.permute.xlu0 0
      %1108 = vperm.xlu0 %1107, %v982
      %v1109 = vpop.permute.xlu0 %1108
      %v1111 = vsub.f32 %v880, %v1034
      %v1112 = vsub.f32 %v882, %v1039
      %v1113 = vsub.f32 %v885, %v1044
      %v1114 = vsub.f32 %v887, %v1049
      %v1115 = vsub.f32 %v890, %v1054
      %v1116 = vsub.f32 %v892, %v1059
      %v1117 = vsub.f32 %v895, %v1064
      %v1118 = vsub.f32 %v897, %v1069
      %v1119 = vsub.f32 %v900, %v1074
      %v1120 = vsub.f32 %v902, %v1079
      %v1121 = vsub.f32 %v905, %v1084
      %v1122 = vsub.f32 %v907, %v1089
      %v1123 = vsub.f32 %v910, %v1094
      %v1124 = vsub.f32 %v912, %v1099
      %v1125 = vsub.f32 %v915, %v1104
      %v1126 = vsub.f32 %v917, %v1109
      %v1127 = vmul.f32 %v1111, 1.442695
      %v1128 = vpow.pop %v1127
      %v1129 = vmul.f32 %v1112, 1.442695
      %v1130 = vpow.pop %v1129
      %v1131 = vmul.f32 %v1113, 1.442695
      %v1132 = vpow.pop %v1131
      %v1133 = vmul.f32 %v1114, 1.442695
      %v1134 = vpow.pop %v1133
      %v1135 = vmul.f32 %v1115, 1.442695
      %v1136 = vpow.pop %v1135
      %v1137 = vmul.f32 %v1116, 1.442695
      %v1138 = vpow.pop %v1137
      %v1139 = vmul.f32 %v1117, 1.442695
      %v1140 = vpow.pop %v1139
      %v1141 = vmul.f32 %v1118, 1.442695
      %v1142 = vpow.pop %v1141
      %v1143 = vmul.f32 %v1119, 1.442695
      %v1144 = vpow.pop %v1143
      %v1145 = vmul.f32 %v1120, 1.442695
      %v1146 = vpow.pop %v1145
      %v1147 = vmul.f32 %v1121, 1.442695
      %v1148 = vpow.pop %v1147
      %v1149 = vmul.f32 %v1122, 1.442695
      %v1150 = vpow.pop %v1149
      %v1151 = vmul.f32 %v1123, 1.442695
      %v1152 = vpow.pop %v1151
      %v1153 = vmul.f32 %v1124, 1.442695
      %v1154 = vpow.pop %v1153
      %v1155 = vmul.f32 %v1125, 1.442695
      %v1156 = vpow.pop %v1155
      %v1157 = vmul.f32 %v1126, 1.442695
      %v1158 = vpow.pop %v1157
      %v1159 = vld [vmem:[#allocation4] sm:$0xff]
      %v1160 = vld [vmem:[#allocation4 + $0x8] sm:$0xff]
      %v1161 = vld [vmem:[#allocation4 + $0x10] sm:$0xff]
      %v1162 = vld [vmem:[#allocation4 + $0x18] sm:$0xff]
      %v1163 = vld [vmem:[#allocation4 + $0x20] sm:$0xff]
      %v1164 = vld [vmem:[#allocation4 + $0x28] sm:$0xff]
      %v1165 = vld [vmem:[#allocation4 + $0x30] sm:$0xff]
      %v1166 = vld [vmem:[#allocation4 + $0x38] sm:$0xff]
      %v1167 = vld [vmem:[#allocation4 + $0x40] sm:$0xff]
      %v1168 = vld [vmem:[#allocation4 + $0x48] sm:$0xff]
      %v1169 = vld [vmem:[#allocation4 + $0x50] sm:$0xff]
      %v1170 = vld [vmem:[#allocation4 + $0x58] sm:$0xff]
      %v1171 = vld [vmem:[#allocation4 + $0x60] sm:$0xff]
      %v1172 = vld [vmem:[#allocation4 + $0x68] sm:$0xff]
      %v1173 = vld [vmem:[#allocation4 + $0x70] sm:$0xff]
      %v1174 = vld [vmem:[#allocation4 + $0x78] sm:$0xff]
      %v1175 = vmul.f32 %v1000, %v1159
      %v1176 = vmul.f32 %v1002, %v1160
      %v1177 = vmul.f32 %v1004, %v1161
      %v1178 = vmul.f32 %v1006, %v1162
      %v1179 = vmul.f32 %v1008, %v1163
      %v1180 = vmul.f32 %v1010, %v1164
      %v1181 = vmul.f32 %v1012, %v1165
      %v1182 = vmul.f32 %v1014, %v1166
      %v1183 = vmul.f32 %v1016, %v1167
      %v1184 = vmul.f32 %v1018, %v1168
      %v1185 = vmul.f32 %v1020, %v1169
      %v1186 = vmul.f32 %v1022, %v1170
      %v1187 = vmul.f32 %v1024, %v1171
      %v1188 = vmul.f32 %v1026, %v1172
      %v1189 = vmul.f32 %v1028, %v1173
      %v1190 = vmul.f32 %v1030, %v1174
      %1191 = vadd.xlane.f32.xlu0 %v1128
      %v1192 = vpop.xlane.xlu0 %1191
      %1193 = vadd.xlane.f32.xlu0 %v1130
      %v1194 = vpop.xlane.xlu0 %1193
      %1195 = vadd.xlane.f32.xlu0 %v1132
      %v1196 = vpop.xlane.xlu0 %1195
      %1197 = vadd.xlane.f32.xlu0 %v1134
      %v1198 = vpop.xlane.xlu0 %1197
      %1199 = vadd.xlane.f32.xlu0 %v1136
      %v1200 = vpop.xlane.xlu0 %1199
      %1201 = vadd.xlane.f32.xlu0 %v1138
      %v1202 = vpop.xlane.xlu0 %1201
      %1203 = vadd.xlane.f32.xlu0 %v1140
      %v1204 = vpop.xlane.xlu0 %1203
      %1205 = vadd.xlane.f32.xlu0 %v1142
      %v1206 = vpop.xlane.xlu0 %1205
      %1207 = vadd.xlane.f32.xlu0 %v1144
      %v1208 = vpop.xlane.xlu0 %1207
      %1209 = vadd.xlane.f32.xlu0 %v1146
      %v1210 = vpop.xlane.xlu0 %1209
      %1211 = vadd.xlane.f32.xlu0 %v1148
      %v1212 = vpop.xlane.xlu0 %1211
      %1213 = vadd.xlane.f32.xlu0 %v1150
      %v1214 = vpop.xlane.xlu0 %1213
      %1215 = vadd.xlane.f32.xlu0 %v1152
      %v1216 = vpop.xlane.xlu0 %1215
      %1217 = vadd.xlane.f32.xlu0 %v1154
      %v1218 = vpop.xlane.xlu0 %1217
      %1219 = vadd.xlane.f32.xlu0 %v1156
      %v1220 = vpop.xlane.xlu0 %1219
      %1221 = vadd.xlane.f32.xlu0 %v1158
      %v1222 = vpop.xlane.xlu0 %1221
      %v1223 = vadd.f32 %v1175, %v1192
      %v1224 = vadd.f32 %v1176, %v1194
      %v1225 = vadd.f32 %v1177, %v1196
      %v1226 = vadd.f32 %v1178, %v1198
      %v1227 = vadd.f32 %v1179, %v1200
      %v1228 = vadd.f32 %v1180, %v1202
      %v1229 = vadd.f32 %v1181, %v1204
      %v1230 = vadd.f32 %v1182, %v1206
      %v1231 = vadd.f32 %v1183, %v1208
      %v1232 = vadd.f32 %v1184, %v1210
      %v1233 = vadd.f32 %v1185, %v1212
      %v1234 = vadd.f32 %v1186, %v1214
      %v1235 = vadd.f32 %v1187, %v1216
      %v1236 = vadd.f32 %v1188, %v1218
      %v1237 = vadd.f32 %v1189, %v1220
      %v1238 = vadd.f32 %v1190, %v1222
      %vm1239 = vcmask 7168
      %1240 = vst.msk [vmem:[#allocation4] sm:$0xff] %vm1239, %v1223
      %1241 = vst.msk [vmem:[#allocation4 + $0x8] sm:$0xff] %vm1239, %v1224
      %1242 = vst.msk [vmem:[#allocation4 + $0x10] sm:$0xff] %vm1239, %v1225
      %1243 = vst.msk [vmem:[#allocation4 + $0x18] sm:$0xff] %vm1239, %v1226
      %1244 = vst.msk [vmem:[#allocation4 + $0x20] sm:$0xff] %vm1239, %v1227
      %1245 = vst.msk [vmem:[#allocation4 + $0x28] sm:$0xff] %vm1239, %v1228
      %1246 = vst.msk [vmem:[#allocation4 + $0x30] sm:$0xff] %vm1239, %v1229
      %1247 = vst.msk [vmem:[#allocation4 + $0x38] sm:$0xff] %vm1239, %v1230
      %1248 = vst.msk [vmem:[#allocation4 + $0x40] sm:$0xff] %vm1239, %v1231
      %1249 = vst.msk [vmem:[#allocation4 + $0x48] sm:$0xff] %vm1239, %v1232
      %1250 = vst.msk [vmem:[#allocation4 + $0x50] sm:$0xff] %vm1239, %v1233
      %1251 = vst.msk [vmem:[#allocation4 + $0x58] sm:$0xff] %vm1239, %v1234
      %1252 = vst.msk [vmem:[#allocation4 + $0x60] sm:$0xff] %vm1239, %v1235
      %1253 = vst.msk [vmem:[#allocation4 + $0x68] sm:$0xff] %vm1239, %v1236
      %1254 = vst.msk [vmem:[#allocation4 + $0x70] sm:$0xff] %vm1239, %v1237
      %1255 = vst.msk [vmem:[#allocation4 + $0x78] sm:$0xff] %vm1239, %v1238
      %v1256 = vld [vmem:[#allocation5] sm:$0xff]
      %v1257 = vld [vmem:[#allocation5 + $0x8] sm:$0xff]
      %v1258 = vld [vmem:[#allocation5 + $0x10] sm:$0xff]
      %v1259 = vld [vmem:[#allocation5 + $0x18] sm:$0xff]
      %v1260 = vld [vmem:[#allocation5 + $0x20] sm:$0xff]
      %v1261 = vld [vmem:[#allocation5 + $0x28] sm:$0xff]
      %v1262 = vld [vmem:[#allocation5 + $0x30] sm:$0xff]
      %v1263 = vld [vmem:[#allocation5 + $0x38] sm:$0xff]
      %v1264 = vld [vmem:[#allocation5 + $0x40] sm:$0xff]
      %v1265 = vld [vmem:[#allocation5 + $0x48] sm:$0xff]
      %v1266 = vld [vmem:[#allocation5 + $0x50] sm:$0xff]
      %v1267 = vld [vmem:[#allocation5 + $0x58] sm:$0xff]
      %v1268 = vld [vmem:[#allocation5 + $0x60] sm:$0xff]
      %v1269 = vld [vmem:[#allocation5 + $0x68] sm:$0xff]
      %v1270 = vld [vmem:[#allocation5 + $0x70] sm:$0xff]
      %v1271 = vld [vmem:[#allocation5 + $0x78] sm:$0xff]
      %1273 = vset.pattern.permute.xlu0 0
      %1274 = vperm.xlu0 %1273, %v1000
      %v1275 = vpop.permute.xlu0 %1274
      %1278 = vset.pattern.permute.xlu0 0
      %1279 = vperm.xlu0 %1278, %v1002
      %v1280 = vpop.permute.xlu0 %1279
      %1283 = vset.pattern.permute.xlu0 0
      %1284 = vperm.xlu0 %1283, %v1004
      %v1285 = vpop.permute.xlu0 %1284
      %1288 = vset.pattern.permute.xlu0 0
      %1289 = vperm.xlu0 %1288, %v1006
      %v1290 = vpop.permute.xlu0 %1289
      %1293 = vset.pattern.permute.xlu0 0
      %1294 = vperm.xlu0 %1293, %v1008
      %v1295 = vpop.permute.xlu0 %1294
      %1298 = vset.pattern.permute.xlu0 0
      %1299 = vperm.xlu0 %1298, %v1010
      %v1300 = vpop.permute.xlu0 %1299
      %1303 = vset.pattern.permute.xlu0 0
      %1304 = vperm.xlu0 %1303, %v1012
      %v1305 = vpop.permute.xlu0 %1304
      %1308 = vset.pattern.permute.xlu0 0
      %1309 = vperm.xlu0 %1308, %v1014
      %v1310 = vpop.permute.xlu0 %1309
      %1313 = vset.pattern.permute.xlu0 0
      %1314 = vperm.xlu0 %1313, %v1016
      %v1315 = vpop.permute.xlu0 %1314
      %1318 = vset.pattern.permute.xlu0 0
      %1319 = vperm.xlu0 %1318, %v1018
      %v1320 = vpop.permute.xlu0 %1319
      %1323 = vset.pattern.permute.xlu0 0
      %1324 = vperm.xlu0 %1323, %v1020
      %v1325 = vpop.permute.xlu0 %1324
      %1328 = vset.pattern.permute.xlu0 0
      %1329 = vperm.xlu0 %1328, %v1022
      %v1330 = vpop.permute.xlu0 %1329
      %1333 = vset.pattern.permute.xlu0 0
      %1334 = vperm.xlu0 %1333, %v1024
      %v1335 = vpop.permute.xlu0 %1334
      %1338 = vset.pattern.permute.xlu0 0
      %1339 = vperm.xlu0 %1338, %v1026
      %v1340 = vpop.permute.xlu0 %1339
      %1343 = vset.pattern.permute.xlu0 0
      %1344 = vperm.xlu0 %1343, %v1028
      %v1345 = vpop.permute.xlu0 %1344
      %1348 = vset.pattern.permute.xlu0 0
      %1349 = vperm.xlu0 %1348, %v1030
      %v1350 = vpop.permute.xlu0 %1349
      %v1352 = vmul.f32 %v1275, %v1256
      %v1353 = vmul.f32 %v1280, %v1257
      %v1354 = vmul.f32 %v1285, %v1258
      %v1355 = vmul.f32 %v1290, %v1259
      %v1356 = vmul.f32 %v1295, %v1260
      %v1357 = vmul.f32 %v1300, %v1261
      %v1358 = vmul.f32 %v1305, %v1262
      %v1359 = vmul.f32 %v1310, %v1263
      %v1360 = vmul.f32 %v1315, %v1264
      %v1361 = vmul.f32 %v1320, %v1265
      %v1362 = vmul.f32 %v1325, %v1266
      %v1363 = vmul.f32 %v1330, %v1267
      %v1364 = vmul.f32 %v1335, %v1268
      %v1365 = vmul.f32 %v1340, %v1269
      %v1366 = vmul.f32 %v1345, %v1270
      %v1367 = vmul.f32 %v1350, %v1271
      %v1368 = vpack.c.bf16 %v1130, %v1128
      %v1369 = vpack.c.bf16 %v1134, %v1132
      %v1370 = vpack.c.bf16 %v1138, %v1136
      %v1371 = vpack.c.bf16 %v1142, %v1140
      %v1372 = vpack.c.bf16 %v1146, %v1144
      %v1373 = vpack.c.bf16 %v1150, %v1148
      %v1374 = vpack.c.bf16 %v1154, %v1152
      %v1375 = vpack.c.bf16 %v1158, %v1156
      %1376 = vmatpush.bf16.msra.mxu0 %v740
      %1377 = vmatpush.bf16.msra.mxu0 %v739
      %1378 = vmatpush.bf16.msra.mxu0 %v738
      %1379 = vmatpush.bf16.msra.mxu0 %v737
      %1380 = vmatpush.bf16.msra.mxu0 %v736
      %1381 = vmatpush.bf16.msra.mxu0 %v735
      %1382 = vmatpush.bf16.msra.mxu0 %v734
      %1383 = vmatpush.bf16.msra.mxu0 %v733
      %1384 = vmatmul.bf16.gmra.mxu0 %v1368
      %v1385 = vpop.f32.mrf.mxu0
      %v1386 = vadd.f32 0.0, %v1385
      %v1387 = vpop.f32.mrf.mxu0
      %v1388 = vadd.f32 0.0, %v1387
      %1389 = vmatmul.bf16.gmra.mxu0 %v1369
      %v1390 = vpop.f32.mrf.mxu0
      %v1391 = vadd.f32 0.0, %v1390
      %v1392 = vpop.f32.mrf.mxu0
      %v1393 = vadd.f32 0.0, %v1392
      %1394 = vmatmul.bf16.gmra.mxu0 %v1370
      %v1395 = vpop.f32.mrf.mxu0
      %v1396 = vadd.f32 0.0, %v1395
      %v1397 = vpop.f32.mrf.mxu0
      %v1398 = vadd.f32 0.0, %v1397
      %1399 = vmatmul.bf16.gmra.mxu0 %v1371
      %v1400 = vpop.f32.mrf.mxu0
      %v1401 = vadd.f32 0.0, %v1400
      %v1402 = vpop.f32.mrf.mxu0
      %v1403 = vadd.f32 0.0, %v1402
      %1404 = vmatmul.bf16.gmra.mxu0 %v1372
      %v1405 = vpop.f32.mrf.mxu0
      %v1406 = vadd.f32 0.0, %v1405
      %v1407 = vpop.f32.mrf.mxu0
      %v1408 = vadd.f32 0.0, %v1407
      %1409 = vmatmul.bf16.gmra.mxu0 %v1373
      %v1410 = vpop.f32.mrf.mxu0
      %v1411 = vadd.f32 0.0, %v1410
      %v1412 = vpop.f32.mrf.mxu0
      %v1413 = vadd.f32 0.0, %v1412
      %1414 = vmatmul.bf16.gmra.mxu0 %v1374
      %v1415 = vpop.f32.mrf.mxu0
      %v1416 = vadd.f32 0.0, %v1415
      %v1417 = vpop.f32.mrf.mxu0
      %v1418 = vadd.f32 0.0, %v1417
      %1419 = vmatmul.bf16.gmra.mxu0 %v1375
      %v1420 = vpop.f32.mrf.mxu0
      %v1421 = vadd.f32 0.0, %v1420
      %v1422 = vpop.f32.mrf.mxu0
      %v1423 = vadd.f32 0.0, %v1422
      %1424 = vdwg.mxu0
      %v1425 = vadd.f32 %v1352, %v1386
      %v1426 = vadd.f32 %v1353, %v1388
      %v1427 = vadd.f32 %v1354, %v1391
      %v1428 = vadd.f32 %v1355, %v1393
      %v1429 = vadd.f32 %v1356, %v1396
      %v1430 = vadd.f32 %v1357, %v1398
      %v1431 = vadd.f32 %v1358, %v1401
      %v1432 = vadd.f32 %v1359, %v1403
      %v1433 = vadd.f32 %v1360, %v1406
      %v1434 = vadd.f32 %v1361, %v1408
      %v1435 = vadd.f32 %v1362, %v1411
      %v1436 = vadd.f32 %v1363, %v1413
      %v1437 = vadd.f32 %v1364, %v1416
      %v1438 = vadd.f32 %v1365, %v1418
      %v1439 = vadd.f32 %v1366, %v1421
      %v1440 = vadd.f32 %v1367, %v1423
      %1441 = vst.msk [vmem:[#allocation5] sm:$0xff] %vm659, %v1425
      %1442 = vst.msk [vmem:[#allocation5 + $0x8] sm:$0xff] %vm659, %v1426
      %1443 = vst.msk [vmem:[#allocation5 + $0x10] sm:$0xff] %vm659, %v1427
      %1444 = vst.msk [vmem:[#allocation5 + $0x18] sm:$0xff] %vm659, %v1428
      %1445 = vst.msk [vmem:[#allocation5 + $0x20] sm:$0xff] %vm659, %v1429
      %1446 = vst.msk [vmem:[#allocation5 + $0x28] sm:$0xff] %vm659, %v1430
      %1447 = vst.msk [vmem:[#allocation5 + $0x30] sm:$0xff] %vm659, %v1431
      %1448 = vst.msk [vmem:[#allocation5 + $0x38] sm:$0xff] %vm659, %v1432
      %1449 = vst.msk [vmem:[#allocation5 + $0x40] sm:$0xff] %vm659, %v1433
      %1450 = vst.msk [vmem:[#allocation5 + $0x48] sm:$0xff] %vm659, %v1434
      %1451 = vst.msk [vmem:[#allocation5 + $0x50] sm:$0xff] %vm659, %v1435
      %1452 = vst.msk [vmem:[#allocation5 + $0x58] sm:$0xff] %vm659, %v1436
      %1453 = vst.msk [vmem:[#allocation5 + $0x60] sm:$0xff] %vm659, %v1437
      %1454 = vst.msk [vmem:[#allocation5 + $0x68] sm:$0xff] %vm659, %v1438
      %1455 = vst.msk [vmem:[#allocation5 + $0x70] sm:$0xff] %vm659, %v1439
      %1456 = vst.msk [vmem:[#allocation5 + $0x78] sm:$0xff] %vm659, %v1440
      %1457 = vst.msk [vmem:[#allocation3] sm:$0xff] %vm1239, %v967
      %1458 = vst.msk [vmem:[#allocation3 + $0x8] sm:$0xff] %vm1239, %v968
      %1459 = vst.msk [vmem:[#allocation3 + $0x10] sm:$0xff] %vm1239, %v969
      %1460 = vst.msk [vmem:[#allocation3 + $0x18] sm:$0xff] %vm1239, %v970
      %1461 = vst.msk [vmem:[#allocation3 + $0x20] sm:$0xff] %vm1239, %v971
      %1462 = vst.msk [vmem:[#allocation3 + $0x28] sm:$0xff] %vm1239, %v972
      %1463 = vst.msk [vmem:[#allocation3 + $0x30] sm:$0xff] %vm1239, %v973
      %1464 = vst.msk [vmem:[#allocation3 + $0x38] sm:$0xff] %vm1239, %v974
      %1465 = vst.msk [vmem:[#allocation3 + $0x40] sm:$0xff] %vm1239, %v975
      %1466 = vst.msk [vmem:[#allocation3 + $0x48] sm:$0xff] %vm1239, %v976
      %1467 = vst.msk [vmem:[#allocation3 + $0x50] sm:$0xff] %vm1239, %v977
      %1468 = vst.msk [vmem:[#allocation3 + $0x58] sm:$0xff] %vm1239, %v978
      %1469 = vst.msk [vmem:[#allocation3 + $0x60] sm:$0xff] %vm1239, %v979
      %1470 = vst.msk [vmem:[#allocation3 + $0x68] sm:$0xff] %vm1239, %v980
      %1471 = vst.msk [vmem:[#allocation3 + $0x70] sm:$0xff] %vm1239, %v981
      %1472 = vst.msk [vmem:[#allocation3 + $0x78] sm:$0xff] %vm1239, %v982
      %p1473 = scmp.eq.s32.totalorder %s26, 1
      // Predicated region
      $region53: #{tpu_custom_call.1} parent=47 // pred_check
        %p1474 = pneg %p1473
      $region54: #{tpu_custom_call.1} parent=47 // pred_check_branch
        %1476 = sbr.rel (%p1474) target = $region56
      $region55: #{tpu_custom_call.1} parent=47 // pred_region
        %v1477 = vld [vmem:[#allocation5] sm:$0xff]
        %v1478 = vld [vmem:[#allocation5 + $0x8] sm:$0xff]
        %v1479 = vld [vmem:[#allocation5 + $0x10] sm:$0xff]
        %v1480 = vld [vmem:[#allocation5 + $0x18] sm:$0xff]
        %v1481 = vld [vmem:[#allocation5 + $0x20] sm:$0xff]
        %v1482 = vld [vmem:[#allocation5 + $0x28] sm:$0xff]
        %v1483 = vld [vmem:[#allocation5 + $0x30] sm:$0xff]
        %v1484 = vld [vmem:[#allocation5 + $0x38] sm:$0xff]
        %v1485 = vld [vmem:[#allocation5 + $0x40] sm:$0xff]
        %v1486 = vld [vmem:[#allocation5 + $0x48] sm:$0xff]
        %v1487 = vld [vmem:[#allocation5 + $0x50] sm:$0xff]
        %v1488 = vld [vmem:[#allocation5 + $0x58] sm:$0xff]
        %v1489 = vld [vmem:[#allocation5 + $0x60] sm:$0xff]
        %v1490 = vld [vmem:[#allocation5 + $0x68] sm:$0xff]
        %v1491 = vld [vmem:[#allocation5 + $0x70] sm:$0xff]
        %v1492 = vld [vmem:[#allocation5 + $0x78] sm:$0xff]
        %v1493 = vld [vmem:[#allocation4] sm:$0xff]
        %v1494 = vld [vmem:[#allocation4 + $0x8] sm:$0xff]
        %v1495 = vld [vmem:[#allocation4 + $0x10] sm:$0xff]
        %v1496 = vld [vmem:[#allocation4 + $0x18] sm:$0xff]
        %v1497 = vld [vmem:[#allocation4 + $0x20] sm:$0xff]
        %v1498 = vld [vmem:[#allocation4 + $0x28] sm:$0xff]
        %v1499 = vld [vmem:[#allocation4 + $0x30] sm:$0xff]
        %v1500 = vld [vmem:[#allocation4 + $0x38] sm:$0xff]
        %v1501 = vld [vmem:[#allocation4 + $0x40] sm:$0xff]
        %v1502 = vld [vmem:[#allocation4 + $0x48] sm:$0xff]
        %v1503 = vld [vmem:[#allocation4 + $0x50] sm:$0xff]
        %v1504 = vld [vmem:[#allocation4 + $0x58] sm:$0xff]
        %v1505 = vld [vmem:[#allocation4 + $0x60] sm:$0xff]
        %v1506 = vld [vmem:[#allocation4 + $0x68] sm:$0xff]
        %v1507 = vld [vmem:[#allocation4 + $0x70] sm:$0xff]
        %v1508 = vld [vmem:[#allocation4 + $0x78] sm:$0xff]
        %v1509 = vrcp.pop %v1493
        %v1510 = vrcp.pop %v1494
        %v1511 = vrcp.pop %v1495
        %v1512 = vrcp.pop %v1496
        %v1513 = vrcp.pop %v1497
        %v1514 = vrcp.pop %v1498
        %v1515 = vrcp.pop %v1499
        %v1516 = vrcp.pop %v1500
        %v1517 = vrcp.pop %v1501
        %v1518 = vrcp.pop %v1502
        %v1519 = vrcp.pop %v1503
        %v1520 = vrcp.pop %v1504
        %v1521 = vrcp.pop %v1505
        %v1522 = vrcp.pop %v1506
        %v1523 = vrcp.pop %v1507
        %v1524 = vrcp.pop %v1508
        %1526 = vset.pattern.permute.xlu0 0
        %1527 = vperm.xlu0 %1526, %v1509
        %v1528 = vpop.permute.xlu0 %1527
        %1531 = vset.pattern.permute.xlu0 0
        %1532 = vperm.xlu0 %1531, %v1510
        %v1533 = vpop.permute.xlu0 %1532
        %1536 = vset.pattern.permute.xlu0 0
        %1537 = vperm.xlu0 %1536, %v1511
        %v1538 = vpop.permute.xlu0 %1537
        %1541 = vset.pattern.permute.xlu0 0
        %1542 = vperm.xlu0 %1541, %v1512
        %v1543 = vpop.permute.xlu0 %1542
        %1546 = vset.pattern.permute.xlu0 0
        %1547 = vperm.xlu0 %1546, %v1513
        %v1548 = vpop.permute.xlu0 %1547
        %1551 = vset.pattern.permute.xlu0 0
        %1552 = vperm.xlu0 %1551, %v1514
        %v1553 = vpop.permute.xlu0 %1552
        %1556 = vset.pattern.permute.xlu0 0
        %1557 = vperm.xlu0 %1556, %v1515
        %v1558 = vpop.permute.xlu0 %1557
        %1561 = vset.pattern.permute.xlu0 0
        %1562 = vperm.xlu0 %1561, %v1516
        %v1563 = vpop.permute.xlu0 %1562
        %1566 = vset.pattern.permute.xlu0 0
        %1567 = vperm.xlu0 %1566, %v1517
        %v1568 = vpop.permute.xlu0 %1567
        %1571 = vset.pattern.permute.xlu0 0
        %1572 = vperm.xlu0 %1571, %v1518
        %v1573 = vpop.permute.xlu0 %1572
        %1576 = vset.pattern.permute.xlu0 0
        %1577 = vperm.xlu0 %1576, %v1519
        %v1578 = vpop.permute.xlu0 %1577
        %1581 = vset.pattern.permute.xlu0 0
        %1582 = vperm.xlu0 %1581, %v1520
        %v1583 = vpop.permute.xlu0 %1582
        %1586 = vset.pattern.permute.xlu0 0
        %1587 = vperm.xlu0 %1586, %v1521
        %v1588 = vpop.permute.xlu0 %1587
        %1591 = vset.pattern.permute.xlu0 0
        %1592 = vperm.xlu0 %1591, %v1522
        %v1593 = vpop.permute.xlu0 %1592
        %1596 = vset.pattern.permute.xlu0 0
        %1597 = vperm.xlu0 %1596, %v1523
        %v1598 = vpop.permute.xlu0 %1597
        %1601 = vset.pattern.permute.xlu0 0
        %1602 = vperm.xlu0 %1601, %v1524
        %v1603 = vpop.permute.xlu0 %1602
        %v1605 = vmul.f32 %v1477, %v1528
        %v1606 = vmul.f32 %v1478, %v1533
        %v1607 = vmul.f32 %v1479, %v1538
        %v1608 = vmul.f32 %v1480, %v1543
        %v1609 = vmul.f32 %v1481, %v1548
        %v1610 = vmul.f32 %v1482, %v1553
        %v1611 = vmul.f32 %v1483, %v1558
        %v1612 = vmul.f32 %v1484, %v1563
        %v1613 = vmul.f32 %v1485, %v1568
        %v1614 = vmul.f32 %v1486, %v1573
        %v1615 = vmul.f32 %v1487, %v1578
        %v1616 = vmul.f32 %v1488, %v1583
        %v1617 = vmul.f32 %v1489, %v1588
        %v1618 = vmul.f32 %v1490, %v1593
        %v1619 = vmul.f32 %v1491, %v1598
        %v1620 = vmul.f32 %v1492, %v1603
        %s1621 = sld [smem:[#allocation6]]
        %v1622 = vstv %s1621
        %v1623 = vmul.f32 %v1622, %v1605
        %v1624 = vmul.f32 %v1622, %v1606
        %v1625 = vmul.f32 %v1622, %v1607
        %v1626 = vmul.f32 %v1622, %v1608
        %v1627 = vmul.f32 %v1622, %v1609
        %v1628 = vmul.f32 %v1622, %v1610
        %v1629 = vmul.f32 %v1622, %v1611
        %v1630 = vmul.f32 %v1622, %v1612
        %v1631 = vmul.f32 %v1622, %v1613
        %v1632 = vmul.f32 %v1622, %v1614
        %v1633 = vmul.f32 %v1622, %v1615
        %v1634 = vmul.f32 %v1622, %v1616
        %v1635 = vmul.f32 %v1622, %v1617
        %v1636 = vmul.f32 %v1622, %v1618
        %v1637 = vmul.f32 %v1622, %v1619
        %v1638 = vmul.f32 %v1622, %v1620
        %v1639 = vld [vmem:[%s340] sm:$0xf]
        %v1640 = vld [vmem:[%s340 + $0x4] sm:$0xf]
        %v1641 = vld [vmem:[%s340 + $0x8] sm:$0xf]
        %v1642 = vld [vmem:[%s340 + $0xc] sm:$0xf]
        %v1643 = vld [vmem:[%s340 + $0x10] sm:$0xf]
        %v1644 = vld [vmem:[%s340 + $0x14] sm:$0xf]
        %v1645 = vld [vmem:[%s340 + $0x18] sm:$0xf]
        %v1646 = vld [vmem:[%s340 + $0x1c] sm:$0xf]
        %v1647 = vld [vmem:[%s340 + $0x20] sm:$0xf]
        %v1648 = vld [vmem:[%s340 + $0x24] sm:$0xf]
        %v1649 = vld [vmem:[%s340 + $0x28] sm:$0xf]
        %v1650 = vld [vmem:[%s340 + $0x2c] sm:$0xf]
        %v1651 = vld [vmem:[%s340 + $0x30] sm:$0xf]
        %v1652 = vld [vmem:[%s340 + $0x34] sm:$0xf]
        %v1653 = vld [vmem:[%s340 + $0x38] sm:$0xf]
        %v1654 = vld [vmem:[%s340 + $0x3c] sm:$0xf]
        %v1655 = vunpack.c.l.bf16 %v1639
        %v1656 = vunpack.c.l.bf16 %v1640
        %v1657 = vunpack.c.l.bf16 %v1641
        %v1658 = vunpack.c.l.bf16 %v1642
        %v1659 = vunpack.c.l.bf16 %v1643
        %v1660 = vunpack.c.l.bf16 %v1644
        %v1661 = vunpack.c.l.bf16 %v1645
        %v1662 = vunpack.c.l.bf16 %v1646
        %v1663 = vunpack.c.l.bf16 %v1647
        %v1664 = vunpack.c.l.bf16 %v1648
        %v1665 = vunpack.c.l.bf16 %v1649
        %v1666 = vunpack.c.l.bf16 %v1650
        %v1667 = vunpack.c.l.bf16 %v1651
        %v1668 = vunpack.c.l.bf16 %v1652
        %v1669 = vunpack.c.l.bf16 %v1653
        %v1670 = vunpack.c.l.bf16 %v1654
        %v1671 = vadd.f32 %v1623, %v1655
        %v1672 = vadd.f32 %v1624, %v1656
        %v1673 = vadd.f32 %v1625, %v1657
        %v1674 = vadd.f32 %v1626, %v1658
        %v1675 = vadd.f32 %v1627, %v1659
        %v1676 = vadd.f32 %v1628, %v1660
        %v1677 = vadd.f32 %v1629, %v1661
        %v1678 = vadd.f32 %v1630, %v1662
        %v1679 = vadd.f32 %v1631, %v1663
        %v1680 = vadd.f32 %v1632, %v1664
        %v1681 = vadd.f32 %v1633, %v1665
        %v1682 = vadd.f32 %v1634, %v1666
        %v1683 = vadd.f32 %v1635, %v1667
        %v1684 = vadd.f32 %v1636, %v1668
        %v1685 = vadd.f32 %v1637, %v1669
        %v1686 = vadd.f32 %v1638, %v1670
        %1687 = vst.msk [vmem:[%s360] sm:$0xff] %vm659, %v1671
        %1688 = vst.msk [vmem:[%s360 + $0x8] sm:$0xff] %vm659, %v1672
        %1689 = vst.msk [vmem:[%s360 + $0x10] sm:$0xff] %vm659, %v1673
        %1690 = vst.msk [vmem:[%s360 + $0x18] sm:$0xff] %vm659, %v1674
        %1691 = vst.msk [vmem:[%s360 + $0x20] sm:$0xff] %vm659, %v1675
        %1692 = vst.msk [vmem:[%s360 + $0x28] sm:$0xff] %vm659, %v1676
        %1693 = vst.msk [vmem:[%s360 + $0x30] sm:$0xff] %vm659, %v1677
        %1694 = vst.msk [vmem:[%s360 + $0x38] sm:$0xff] %vm659, %v1678
        %1695 = vst.msk [vmem:[%s360 + $0x40] sm:$0xff] %vm659, %v1679
        %1696 = vst.msk [vmem:[%s360 + $0x48] sm:$0xff] %vm659, %v1680
        %1697 = vst.msk [vmem:[%s360 + $0x50] sm:$0xff] %vm659, %v1681
        %1698 = vst.msk [vmem:[%s360 + $0x58] sm:$0xff] %vm659, %v1682
        %1699 = vst.msk [vmem:[%s360 + $0x60] sm:$0xff] %vm659, %v1683
        %1700 = vst.msk [vmem:[%s360 + $0x68] sm:$0xff] %vm659, %v1684
        %1701 = vst.msk [vmem:[%s360 + $0x70] sm:$0xff] %vm659, %v1685
        %1702 = vst.msk [vmem:[%s360 + $0x78] sm:$0xff] %vm659, %v1686
      $region56: #{tpu_custom_call.1} parent=47 // pred_fallthru
        _
      %s1703 = smul.u32 16, %s25
      %p1704 = scmp.lt.s32.totalorder %s24, 1
      %s1705 = scalar_select %p1704, %s24, 1
      %p1706 = scmp.lt.s32.totalorder %s1703, 31
      %s1707 = scalar_select %p1706, %s1703, 31
      %s1708 = smul.addr %s1705, 32
      %s1709 = sadd.s32 %s1707, %s1708
      %s1710 = smul.addr %s1709, 8
      %s1711 = scalar_lea.vmem %s7, %s1710
      // Predicated region
      $region57: #{tpu_custom_call.1} parent=47 // pred_check
        %p1712 = pneg %p219
      $region58: #{tpu_custom_call.1} parent=47 // pred_check_branch
        %1714 = sbr.rel (%p1712) target = $region60
      $region59: #{tpu_custom_call.1} parent=47 // pred_region
        %s1715 = smul.u32 16, %s25
      $region60: #{tpu_custom_call.1} parent=47 // pred_fallthru
        _
    $region48: #{tpu_custom_call.1} parent=5 // pred_fallthru
      _
    %p1716 = scmp.le.s32.totalorder 2, %s14
    // Predicated region
    $region61: #{tpu_custom_call.1} parent=5 // pred_check
      %p1717 = pneg %p1716
    $region62: #{tpu_custom_call.1} parent=5 // pred_check_branch
      %1719 = sbr.rel (%p1717) target = $region64
    $region63: #{tpu_custom_call.1} parent=5 // pred_region
      %s1720 = ssub.s32 %s14, 2
      // Predicated region
      $region65: #{tpu_custom_call.1} parent=63 // pred_check
        %p1721 = pneg %p225
      $region66: #{tpu_custom_call.1} parent=63 // pred_check_branch
        %1723 = sbr.rel (%p1721) target = $region68
      $region67: #{tpu_custom_call.1} parent=63 // pred_region
        %s1724 = smul.u32 16, %s28
        %p1725 = scmp.lt.s32.totalorder %s27, 1
        %s1726 = scalar_select %p1725, %s27, 1
        %p1727 = scmp.lt.s32.totalorder %s1724, 31
        %s1728 = scalar_select %p1727, %s1724, 31
        %s1729 = smul.addr %s1726, 32
        %s1730 = sadd.s32 %s1728, %s1729
        %s1731 = smul.addr %s1730, 8
        %s1732 = scalar_lea.vmem %s7, %s1731
      $region68: #{tpu_custom_call.1} parent=63 // pred_fallthru
        _
    $region64: #{tpu_custom_call.1} parent=5 // pred_fallthru
      _
  $region6: #{tpu_custom_call.1} parent=0 // loop_footer
    %s18 = sadd.s32 1, %s14
  $region7: #{tpu_custom_call.1} parent=0 // loop_footer_branch
    %13 = sbr.rel target = $region3
  $region8: #{tpu_custom_call.1} parent=0 // loop_exit
    _

</llo_original>
